<compile_context>
chip_gen: v7x
topology: tpu7x:2x2x1
jax: 0.10.0
libtpu: 0.0.40
codegen_flags: <defaults>
</compile_context>

<pallas_src>
import jax
import jax.numpy as jnp
from jax.experimental import pallas as pl
from jax.experimental.pallas import tpu as pltpu


D_CONV = 1800          # 8 * 15 * 15
D_FLAT = 5
D_ENT_IN = 5
D_X = 1808             # conv (1800) | flat (5) | 3 zero pad columns


# ----------------------------- Pallas kernel -------------------------------

def fcent_kernel(x_ref, ents_ref, w_ent_ref, w1x_ref, w1e_ref, b1_ref, o_ref):
    tb, hp = o_ref.shape
    n = ents_ref.shape[0] // tb            # padded entities per observation

    # ent1 (bias folded into b1'): (TB*N, 5) @ (5, Hp), f32 accumulation.
    e = jnp.dot(ents_ref[...], w_ent_ref[...], preferred_element_type=jnp.float32)
    # Per-observation max over the N entity rows (rows are grouped per obs;
    # n is a multiple of 8 so this reshape is layout-preserving).
    e_max = jnp.max(e.reshape(tb, n, hp), axis=1)                  # (TB, Hp)

    # fc1 over the (conv | flat | 0) slab: bf16 operands, f32 MXU accumulation.
    y = jnp.dot(x_ref[...].astype(jnp.bfloat16), w1x_ref[...],
                preferred_element_type=jnp.float32)
    # fc1 over the ent segment (small, kept f32 for precision).
    y = y + jnp.dot(e_max, w1e_ref[...], preferred_element_type=jnp.float32)

    o_ref[...] = jnp.maximum(y + b1_ref[...], 0.0)


# ------------------------------- Wrappers ------------------------------------

def _pack_inputs(conv, flat, ents):
    """Layout plumbing shared by the kernel wrapper and the references."""
    b = conv.shape[0]
    x = jnp.concatenate(
        [conv.reshape(b, D_CONV).astype(jnp.float32),   # matches torch .view(-1) order
         flat.reshape(b, D_FLAT).astype(jnp.float32),
         jnp.zeros((b, D_X - D_CONV - D_FLAT), jnp.float32)],
        axis=1)                                          # (B, 1808)
    ents = ents.astype(jnp.float32)
    n = ents.shape[1]
    n_pad = max(8, -(-n // 8) * 8)
    if n_pad != n:
        # Pad the entity count by replicating the last row: the per-column max
        # is unchanged (zero rows would corrupt it when all rows are negative).
        rep = jnp.broadcast_to(ents[:, -1:, :], (b, n_pad - n, D_ENT_IN))
        ents = jnp.concatenate([ents, rep], axis=1)
    return x, ents.reshape(b * n_pad, D_ENT_IN), n_pad


def fcent_forward_batched(conv, flat, ents, kparams, *, tb=8):
    """conv (B,8,15,15), flat (B,5), ents (B,N,5) -> (B, h_pad) f32.

    Columns >= h of the result are exactly zero; consumers slice or ignore them
    (a separate per-call slice op costs about as much as this kernel).
    """
    x, ents2d, n_pad = _pack_inputs(conv, flat, ents)
    b = x.shape[0]
    h_pad = kparams["b1"].shape[1]
    tb = min(tb, b)
    assert b % tb == 0, "batch must be a multiple of the B-tile"

    return pl.pallas_call(
        fcent_kernel,
        out_shape=jax.ShapeDtypeStruct((b, h_pad), jnp.float32),
        grid=(b // tb,),
        in_specs=[
            pl.BlockSpec((tb, D_X), lambda i: (i, 0)),               # activation slab
            pl.BlockSpec((tb * n_pad, D_ENT_IN), lambda i: (i, 0)),  # entities
            pl.BlockSpec((D_ENT_IN, h_pad), lambda i: (0, 0)),       # w_ent  (resident)
            pl.BlockSpec((D_X, h_pad), lambda i: (0, 0)),            # w1_x   (resident, bf16)
            pl.BlockSpec((h_pad, h_pad), lambda i: (0, 0)),          # w1_ent (resident)
            pl.BlockSpec((1, h_pad), lambda i: (0, 0)),              # b1'    (resident)
        ],
        out_specs=pl.BlockSpec((tb, h_pad), lambda i: (i, 0)),
        compiler_params=pltpu.CompilerParams(
            dimension_semantics=("parallel",)),  # v7x: 2 TCs split the batch
    )(x, ents2d, kparams["w_ent"], kparams["w1_x"], kparams["w1_ent"], kparams["b1"])


def fcent_forward(conv, flat, ents, kparams):
    """Single-observation forward matching the torch module signature.
    conv (8,15,15), flat (5,), ents (N,5) -> (1, h_pad); columns >= h are 0."""
    return fcent_forward_batched(conv[None], flat[None], ents[None], kparams)


# ----------------------------- Param init -----------------------------------

def init_params(h, key):
    """Returns (torch-layout f32 params for the reference, kernel-layout params)."""
    d_in = D_CONV + D_FLAT + h          # fc1 input = 1805 + h (cat: conv|flat|ent)
    k1, k2, k3, k4 = jax.random.split(key, 4)
    fc_bound = 1.0 / float(d_in) ** 0.5
    ent_bound = 1.0 / float(D_ENT_IN) ** 0.5
    # torch-style Linear(in, out): weight (out, in), bias (out,)
    w_fc = jax.random.uniform(k1, (h, d_in), jnp.float32, -fc_bound, fc_bound)
    b_fc = jax.random.uniform(k2, (h,), jnp.float32, -fc_bound, fc_bound)
    w_ent = jax.random.uniform(k3, (h, D_ENT_IN), jnp.float32, -ent_bound, ent_bound)
    b_ent = jax.random.uniform(k4, (h,), jnp.float32, -ent_bound, ent_bound)
    full = {"w_fc": w_fc, "b_fc": b_fc, "w_ent": w_ent, "b_ent": b_ent}

    # Kernel layout: transpose, merge conv|flat segments, pad h -> multiple of
    # 128 (not 256 -- DMA-bound), fold the ent1 bias into fc1's bias.
    h_pad = ((h + 127) // 128) * 128

    def pad_cols(a):
        return jnp.pad(a, ((0, 0), (0, h_pad - a.shape[1])))

    w_fc_t = w_fc.T                                                   # (d_in, h)
    w1_convflat = pad_cols(w_fc_t[:D_CONV + D_FLAT])                  # (1805, h_pad)
    w1_x = jnp.pad(w1_convflat, ((0, D_X - (D_CONV + D_FLAT)), (0, 0)))  # (1808, h_pad)
    w1_ent = jnp.pad(w_fc_t[D_CONV + D_FLAT:],
                     ((0, h_pad - h), (0, h_pad - h)))                # (h_pad, h_pad)
    b_ent_row = pad_cols(b_ent.reshape(1, h))                         # (1, h_pad)
    # Fold ent1 bias: max_n(e@We + be) @ W1e == max_n(e@We) @ W1e + be @ W1e
    b1 = pad_cols(b_fc.reshape(1, h)) + b_ent_row @ w1_ent            # (1, h_pad)

    kparams = {
        "w_ent": pad_cols(w_ent.T),          # (5, h_pad)    f32 (tiny)
        "w1_x": w1_x.astype(jnp.bfloat16),   # (1808, h_pad) bf16: halves dominant DMA
        "w1_ent": w1_ent,                    # (h_pad, h_pad) f32 (small at h_pad=128)
        "b1": b1,                            # (1, h_pad)    f32, includes folded b_ent
    }
    # TODO(synk): per-generation sub-bf16 weight quant (int8 on v5e/v6e, fp8 on
    # v7x) would further halve weight DMA; omitted to keep one portable dtype.
    return full, kparams


# ----------------------------- References -----------------------------------

def fcent_reference_module(conv, flat, ents, full):
    """Pure-JAX f32 mirror of the torch module (one observation)."""
    e = ents @ full["w_ent"].T + full["b_ent"]
    e_max = jnp.max(e, axis=0)
    x = jnp.concatenate([conv.reshape(-1), flat, e_max]).reshape(1, -1)
    return jnp.maximum(x @ full["w_fc"].T + full["b_fc"], 0.0)


def fcent_reference_kparams(conv, flat, ents, kparams):
    """Pure-JAX mirror of the kernel math (same bf16 rounding, same padding)."""
    x, ents2d, n_pad = _pack_inputs(conv, flat, ents)
    b = x.shape[0]
    hp = kparams["b1"].shape[1]
    e = ents2d @ kparams["w_ent"]
    e_max = jnp.max(e.reshape(b, n_pad, hp), axis=1)
    y = jnp.dot(x.astype(jnp.bfloat16), kparams["w1_x"],
                preferred_element_type=jnp.float32)
    y = y + e_max @ kparams["w1_ent"]
    return jnp.maximum(y + kparams["b1"], 0.0)


if __name__ == "__main__":
    h = 32
    batch = 16      # 2 grid steps of TB=8 -> exercises the resident-weight pipeline
    n_ents = 5      # padded to 8 inside the wrapper by row replication

    key = jax.random.PRNGKey(0)
    k_conv, k_flat, k_ents, k_params = jax.random.split(key, 4)
    conv = jax.random.normal(k_conv, (batch, 8, 15, 15), jnp.float32)
    flat = jax.random.normal(k_flat, (batch, D_FLAT), jnp.float32)
    ents = jax.random.normal(k_ents, (batch, n_ents, D_ENT_IN), jnp.float32)

    full, kparams = init_params(h, k_params)
    h_pad = kparams["b1"].shape[1]

    out = jax.block_until_ready(fcent_forward_batched(conv, flat, ents, kparams))
    assert out.shape == (batch, h_pad), out.shape
    # Padded hidden columns are exactly zero (relu of an exactly-zero pre-act).
    assert bool(jnp.all(out[:, h:] == 0.0))

    # (a) Tight check vs a pure-JAX mirror of the kernel math (same bf16 weights).
    ref_k = fcent_reference_kparams(conv, flat, ents, kparams)
    assert jnp.allclose(out[:, :h], ref_k[:, :h], atol=2e-3, rtol=2e-3), \
        "mismatch vs kernel-math reference"

    # (b) Module-parity check vs the full-precision torch-equivalent reference
    #     (per-observation, unpadded ents); loose tol covers bf16 weight rounding.
    ref = jnp.stack([fcent_reference_module(conv[b], flat[b], ents[b], full)[0]
                     for b in range(batch)])
    assert jnp.allclose(out[:, :h], ref, atol=5e-2, rtol=5e-2), \
        "mismatch vs torch-equivalent f32 reference"

    # Single-observation path (original module signature).
    out1 = jax.block_until_ready(fcent_forward(conv[0], flat[0], ents[0], kparams))
    assert out1.shape == (1, h_pad)
    assert jnp.allclose(out1[0, :h], ref[0], atol=5e-2, rtol=5e-2)

    print("KERNEL_OK")
</pallas_src>

<mosaic_0001>
module attributes {stable_mosaic.version = 11 : i64} {
  func.func @fcent_kernel(%arg0: i32, %arg1: memref<8x1808xf32, #tpu.memory_space<vmem>>, %arg2: memref<64x5xf32, #tpu.memory_space<vmem>>, %arg3: memref<5x128xf32, #tpu.memory_space<vmem>>, %arg4: memref<1808x128xbf16, #tpu.memory_space<vmem>>, %arg5: memref<128x128xf32, #tpu.memory_space<vmem>>, %arg6: memref<1x128xf32, #tpu.memory_space<vmem>>, %arg7: memref<8x128xf32, #tpu.memory_space<vmem>>) attributes {dimension_semantics = [#tpu.dimension_semantics<parallel>], iteration_bounds = array<i64: 2>, scalar_prefetch = 0 : i64, scratch_operands = 0 : i64, tpu.core_type = #tpu.core_type<tc>, window_params = [{transform_indices = @transform_0, window_bounds = array<i64: 8, 1808>}, {transform_indices = @transform_1, window_bounds = array<i64: 64, 5>}, {pipeline_mode = #tpu.pipeline_mode<synchronous>, transform_indices = @transform_2, window_bounds = array<i64: 5, 128>}, {pipeline_mode = #tpu.pipeline_mode<synchronous>, transform_indices = @transform_3, window_bounds = array<i64: 1808, 128>}, {pipeline_mode = #tpu.pipeline_mode<synchronous>, transform_indices = @transform_4, window_bounds = array<i64: 128, 128>}, {pipeline_mode = #tpu.pipeline_mode<synchronous>, transform_indices = @transform_5, window_bounds = array<i64: 1, 128>}, {transform_indices = @transform_6, window_bounds = array<i64: 8, 128>}]} {
    %c0 = arith.constant 0 : index
    %c0_0 = arith.constant 0 : index
    %0 = vector.load %arg2[%c0, %c0_0] : memref<64x5xf32, #tpu.memory_space<vmem>>, vector<64x5xf32>
    %c0_1 = arith.constant 0 : index
    %c0_2 = arith.constant 0 : index
    %1 = vector.load %arg3[%c0_1, %c0_2] : memref<5x128xf32, #tpu.memory_space<vmem>>, vector<5x128xf32>
    %cst = arith.constant dense<0.000000e+00> : vector<64x128xf32>
    %2 = tpu.matmul %0, %1, %cst {dimension_numbers = #tpu.dot_dimension_numbers<[1], [0], [0], [1], [0, 0, 1, 1], [], []>} : vector<64x5xf32>, vector<5x128xf32>, vector<64x128xf32> -> vector<64x128xf32>
    %3 = vector.shape_cast %2 : vector<64x128xf32> to vector<8x8x128xf32>
    %cst_3 = arith.constant dense<0xFF800000> : vector<8x128xf32>
    %4 = vector.multi_reduction <maximumf>, %3, %cst_3 [1] : vector<8x8x128xf32> to vector<8x128xf32>
    %c0_4 = arith.constant 0 : index
    %c0_5 = arith.constant 0 : index
    %5 = vector.load %arg1[%c0_4, %c0_5] : memref<8x1808xf32, #tpu.memory_space<vmem>>, vector<8x1808xf32>
    %6 = arith.truncf %5 : vector<8x1808xf32> to vector<8x1808xbf16>
    %c0_6 = arith.constant 0 : index
    %c0_7 = arith.constant 0 : index
    %7 = vector.load %arg4[%c0_6, %c0_7] : memref<1808x128xbf16, #tpu.memory_space<vmem>>, vector<1808x128xbf16>
    %cst_8 = arith.constant dense<0.000000e+00> : vector<8x128xf32>
    %8 = tpu.matmul %6, %7, %cst_8 {dimension_numbers = #tpu.dot_dimension_numbers<[1], [0], [0], [1], [0, 0, 1, 1], [], []>} : vector<8x1808xbf16>, vector<1808x128xbf16>, vector<8x128xf32> -> vector<8x128xf32>
    %c0_9 = arith.constant 0 : index
    %c0_10 = arith.constant 0 : index
    %9 = vector.load %arg5[%c0_9, %c0_10] : memref<128x128xf32, #tpu.memory_space<vmem>>, vector<128x128xf32>
    %cst_11 = arith.constant dense<0.000000e+00> : vector<8x128xf32>
    %10 = tpu.matmul %4, %9, %cst_11 {dimension_numbers = #tpu.dot_dimension_numbers<[1], [0], [0], [1], [0, 0, 1, 1], [], []>} : vector<8x128xf32>, vector<128x128xf32>, vector<8x128xf32> -> vector<8x128xf32>
    %11 = arith.addf %8, %10 : vector<8x128xf32>
    %c0_12 = arith.constant 0 : index
    %c0_13 = arith.constant 0 : index
    %12 = vector.load %arg6[%c0_12, %c0_13] : memref<1x128xf32, #tpu.memory_space<vmem>>, vector<1x128xf32>
    %13 = vector.broadcast %12 : vector<1x128xf32> to vector<8x128xf32>
    %14 = arith.addf %11, %13 : vector<8x128xf32>
    %cst_14 = arith.constant 0.000000e+00 : f32
    %15 = vector.broadcast %cst_14 : f32 to vector<8x128xf32>
    %16 = arith.maximumf %14, %15 : vector<8x128xf32>
    %c0_15 = arith.constant 0 : index
    %c0_16 = arith.constant 0 : index
    %17 = vector.load %arg7[%c0_15, %c0_16] : memref<8x128xf32, #tpu.memory_space<vmem>>, vector<8x128xf32>
    tpu.vector_store %arg7[%c0_15, %c0_16], %16 {strides = array<i32>} : memref<8x128xf32, #tpu.memory_space<vmem>>, vector<8x128xf32>,
    return
  }
  func.func @transform_0(%arg0: i32) -> (i32, i32) {
    %c0_i32 = arith.constant 0 : i32
    %c0_i32_0 = arith.constant 0 : i32
    return %arg0, %c0_i32 : i32, i32
  }
  func.func @transform_1(%arg0: i32) -> (i32, i32) {
    %c0_i32 = arith.constant 0 : i32
    %c0_i32_0 = arith.constant 0 : i32
    return %arg0, %c0_i32 : i32, i32
  }
  func.func @transform_2(%arg0: i32) -> (i32, i32) {
    %c0_i32 = arith.constant 0 : i32
    %c0_i32_0 = arith.constant 0 : i32
    %c0_i32_1 = arith.constant 0 : i32
    return %c0_i32, %c0_i32_0 : i32, i32
  }
  func.func @transform_3(%arg0: i32) -> (i32, i32) {
    %c0_i32 = arith.constant 0 : i32
    %c0_i32_0 = arith.constant 0 : i32
    %c0_i32_1 = arith.constant 0 : i32
    return %c0_i32, %c0_i32_0 : i32, i32
  }
  func.func @transform_4(%arg0: i32) -> (i32, i32) {
    %c0_i32 = arith.constant 0 : i32
    %c0_i32_0 = arith.constant 0 : i32
    %c0_i32_1 = arith.constant 0 : i32
    return %c0_i32, %c0_i32_0 : i32, i32
  }
  func.func @transform_5(%arg0: i32) -> (i32, i32) {
    %c0_i32 = arith.constant 0 : i32
    %c0_i32_0 = arith.constant 0 : i32
    %c0_i32_1 = arith.constant 0 : i32
    return %c0_i32, %c0_i32_0 : i32, i32
  }
  func.func @transform_6(%arg0: i32) -> (i32, i32) {
    %c0_i32 = arith.constant 0 : i32
    %c0_i32_0 = arith.constant 0 : i32
    return %arg0, %c0_i32 : i32, i32
  }
}

</mosaic_0001>

<llo_original>
// kernel: tpu_custom_call.1
$region0: #{tpu_custom_call.1}
  #allocation0 [shape = 'u32[]', space=smem, size = 0x4, offset = 0x4, fixed_abs, tag = 'smem constant byte address 0x4 - core index']
  #allocation1 [shape = 'u32[144,128]{1,0:T(1,128)}', space=vmem, size = 0x12000, scoped, tag = 'internal scratch']
  %s0 = inlined_call_operand.hbm [shape: f32[16,1808], index: 0, kind: input, shape index: {}]
  %s1 = inlined_call_operand.vmem [shape: f32[128,5], index: 1, kind: input, shape index: {}]
  %s2 = inlined_call_operand.vmem [shape: f32[5,128], index: 2, kind: input, shape index: {}]
  %s3 = inlined_call_operand.hbm [shape: bf16[1808,128], index: 3, kind: input, shape index: {}]
  %s4 = inlined_call_operand.vmem [shape: f32[128,128], index: 4, kind: input, shape index: {}]
  %s5 = inlined_call_operand.vmem [shape: f32[1,128], index: 5, kind: input, shape index: {}]
  %s6 = inlined_call_operand.hbm [shape: f32[16,128], index: 6, kind: output, shape index: {}]
  %s7 = sld [smem:[#allocation0]]
  $region65: #{tpu_custom_call.1} parent=0
    _
  %s9 = ssub.s32 1, %s7
  %s10 = scalar_select 0, %s9, %s7
  $region1: #{tpu_custom_call.1} parent=0
    #allocation2 [shape = 'u8[122880]{0}', space=vmem, size = 0x1e000, scoped, tag = 'input window, operand 0']
    #allocation3 [shape = 's32[2]{0}', space=sflag, size = 0x8, scoped, tag = 'scoped memory for tpu_custom_call.1']
    #allocation4 [shape = 's32[2]{0}', space=sflag, size = 0x8, scoped, tag = 'scoped memory for tpu_custom_call.1']
    #allocation5 [shape = 'u8[462848]{0}', space=vmem, size = 0x71000, scoped, tag = 'input window, operand 3, single buffered']
    #allocation6 [shape = 's32[1]{0}', space=sflag, size = 0x4, scoped, tag = 'scoped memory for tpu_custom_call.1']
    #allocation7 [shape = 'u8[8192]{0}', space=vmem, size = 0x2000, scoped, tag = 'output window, operand 0']
    %11 = vsyncpa [#allocation3], 0
    %s12 = scalar_lea.sflag [#allocation3], 1
    %13 = vsyncpa %s12, 0
    %14 = vsyncpa [#allocation6], 0
    %15 = vsyncpa [#allocation4], 0
    %s16 = scalar_lea.sflag [#allocation4], 1
    %17 = vsyncpa %s16, 0
    loop: start=0, step=1, limit=4
    $region2: #{tpu_custom_call.1} parent=1 // loop_pre_header
      _
    $region3: #{tpu_custom_call.1} parent=1 // loop_header
      %s19 = sphi 0, %s23
      %p20 = scmp.ge.s32.totalorder %s19, 4
      %s29 = sphi 0, %s31
      %s32 = sphi 0, %s29
      %s33 = sphi 0, %s32
      %s49 = sphi 0, %s33
      %s55 = sphi 0, %s57
      %s58 = sphi 0, %s55
      %s59 = sphi 0, %s58
      %s75 = sphi 0, %s59
      %s79 = sphi 0, %s79
      %s81 = sphi 0, %s79
      %s82 = sphi 0, %s81
      %s96 = sphi 0, %s82
      %s100 = sphi 0, %s100
      %s102 = sphi 0, %s100
      %s103 = sphi 0, %s102
      %s117 = sphi 0, %s103
      %s121 = sphi 0, %s121
      %s123 = sphi 0, %s121
      %s124 = sphi 0, %s123
      %s138 = sphi 0, %s124
      %s142 = sphi 0, %s142
      %s144 = sphi 0, %s142
      %s145 = sphi 0, %s144
      %s159 = sphi 0, %s145
      %s165 = sphi 0, %s167
      %s168 = sphi 0, %s165
      %s169 = sphi 0, %s168
      %s185 = sphi 0, %s169
    $region4: #{tpu_custom_call.1} parent=1 // loop_header_branch
      %22 = sbr.rel (%p20) target = $region8
    $region5: #{tpu_custom_call.1} parent=1 // loop_body
      %s24 = ssub.s32 %s19, 1
      %s25 = ssub.s32 %s19, 2
      %s26 = sadd.s32 %s19, 1
      %s27 = ssub.s32 %s19, %s26
      %p28 = scmp.eq.s32.totalorder %s27, 0
      %s30 = sadd.s32 %s29, 1
      %s31 = scalar_select %p28, %s29, %s30
      %p34 = pneg %p28
      %p35 = scmp.eq.s32.totalorder %s19, 1
      %p36 = por %p34, %p35
      %p37 = scmp.ne.s32.totalorder %s29, %s32
      %p38 = scmp.eq.s32.totalorder %s19, 0
      %p39 = por %p37, %p38
      %p40 = scmp.ne.s32.totalorder %s29, %s32
      %p41 = scmp.eq.s32.totalorder %s24, 1
      %p42 = por %p40, %p41
      %p43 = scmp.ne.s32.totalorder %s32, %s33
      %p44 = scmp.eq.s32.totalorder %s24, 0
      %p45 = por %p43, %p44
      %p46 = scmp.ne.s32.totalorder %s32, %s33
      %p47 = scmp.eq.s32.totalorder %s25, 1
      %p48 = por %p46, %p47
      %p50 = scmp.ne.s32.totalorder %s33, %s49
      %p51 = scmp.eq.s32.totalorder %s25, 0
      %p52 = por %p50, %p51
      %s53 = ssub.s32 %s19, %s26
      %p54 = scmp.eq.s32.totalorder %s53, 0
      %s56 = sadd.s32 %s55, 1
      %s57 = scalar_select %p54, %s55, %s56
      %p60 = pneg %p54
      %p61 = scmp.eq.s32.totalorder %s19, 1
      %p62 = por %p60, %p61
      %p63 = scmp.ne.s32.totalorder %s55, %s58
      %p64 = scmp.eq.s32.totalorder %s19, 0
      %p65 = por %p63, %p64
      %p66 = scmp.ne.s32.totalorder %s55, %s58
      %p67 = scmp.eq.s32.totalorder %s24, 1
      %p68 = por %p66, %p67
      %p69 = scmp.ne.s32.totalorder %s58, %s59
      %p70 = scmp.eq.s32.totalorder %s24, 0
      %p71 = por %p69, %p70
      %p72 = scmp.ne.s32.totalorder %s58, %s59
      %p73 = scmp.eq.s32.totalorder %s25, 1
      %p74 = por %p72, %p73
      %p76 = scmp.ne.s32.totalorder %s59, %s75
      %p77 = scmp.eq.s32.totalorder %s25, 0
      %p78 = por %p76, %p77
      %s80 = sadd.s32 %s79, 1
      %p83 = scmp.eq.s32.totalorder %s19, 1
      %p84 = scmp.ne.s32.totalorder %s79, %s81
      %p85 = scmp.eq.s32.totalorder %s19, 0
      %p86 = por %p84, %p85
      %p87 = scmp.ne.s32.totalorder %s79, %s81
      %p88 = scmp.eq.s32.totalorder %s24, 1
      %p89 = por %p87, %p88
      %p90 = scmp.ne.s32.totalorder %s81, %s82
      %p91 = scmp.eq.s32.totalorder %s24, 0
      %p92 = por %p90, %p91
      %p93 = scmp.ne.s32.totalorder %s81, %s82
      %p94 = scmp.eq.s32.totalorder %s25, 1
      %p95 = por %p93, %p94
      %p97 = scmp.ne.s32.totalorder %s82, %s96
      %p98 = scmp.eq.s32.totalorder %s25, 0
      %p99 = por %p97, %p98
      %s101 = sadd.s32 %s100, 1
      %p104 = scmp.eq.s32.totalorder %s19, 1
      %p105 = scmp.ne.s32.totalorder %s100, %s102
      %p106 = scmp.eq.s32.totalorder %s19, 0
      %p107 = por %p105, %p106
      %p108 = scmp.ne.s32.totalorder %s100, %s102
      %p109 = scmp.eq.s32.totalorder %s24, 1
      %p110 = por %p108, %p109
      %p111 = scmp.ne.s32.totalorder %s102, %s103
      %p112 = scmp.eq.s32.totalorder %s24, 0
      %p113 = por %p111, %p112
      %p114 = scmp.ne.s32.totalorder %s102, %s103
      %p115 = scmp.eq.s32.totalorder %s25, 1
      %p116 = por %p114, %p115
      %p118 = scmp.ne.s32.totalorder %s103, %s117
      %p119 = scmp.eq.s32.totalorder %s25, 0
      %p120 = por %p118, %p119
      %s122 = sadd.s32 %s121, 1
      %p125 = scmp.eq.s32.totalorder %s19, 1
      %p126 = scmp.ne.s32.totalorder %s121, %s123
      %p127 = scmp.eq.s32.totalorder %s19, 0
      %p128 = por %p126, %p127
      %p129 = scmp.ne.s32.totalorder %s121, %s123
      %p130 = scmp.eq.s32.totalorder %s24, 1
      %p131 = por %p129, %p130
      %p132 = scmp.ne.s32.totalorder %s123, %s124
      %p133 = scmp.eq.s32.totalorder %s24, 0
      %p134 = por %p132, %p133
      %p135 = scmp.ne.s32.totalorder %s123, %s124
      %p136 = scmp.eq.s32.totalorder %s25, 1
      %p137 = por %p135, %p136
      %p139 = scmp.ne.s32.totalorder %s124, %s138
      %p140 = scmp.eq.s32.totalorder %s25, 0
      %p141 = por %p139, %p140
      %s143 = sadd.s32 %s142, 1
      %p146 = scmp.eq.s32.totalorder %s19, 1
      %p147 = scmp.ne.s32.totalorder %s142, %s144
      %p148 = scmp.eq.s32.totalorder %s19, 0
      %p149 = por %p147, %p148
      %p150 = scmp.ne.s32.totalorder %s142, %s144
      %p151 = scmp.eq.s32.totalorder %s24, 1
      %p152 = por %p150, %p151
      %p153 = scmp.ne.s32.totalorder %s144, %s145
      %p154 = scmp.eq.s32.totalorder %s24, 0
      %p155 = por %p153, %p154
      %p156 = scmp.ne.s32.totalorder %s144, %s145
      %p157 = scmp.eq.s32.totalorder %s25, 1
      %p158 = por %p156, %p157
      %p160 = scmp.ne.s32.totalorder %s145, %s159
      %p161 = scmp.eq.s32.totalorder %s25, 0
      %p162 = por %p160, %p161
      %s163 = ssub.s32 %s19, %s26
      %p164 = scmp.eq.s32.totalorder %s163, 0
      %s166 = sadd.s32 %s165, 1
      %s167 = scalar_select %p164, %s165, %s166
      %p170 = pneg %p164
      %p171 = scmp.eq.s32.totalorder %s19, 1
      %p172 = por %p170, %p171
      %p173 = scmp.ne.s32.totalorder %s165, %s168
      %p174 = scmp.eq.s32.totalorder %s19, 0
      %p175 = por %p173, %p174
      %p176 = scmp.ne.s32.totalorder %s165, %s168
      %p177 = scmp.eq.s32.totalorder %s24, 1
      %p178 = por %p176, %p177
      %p179 = scmp.ne.s32.totalorder %s168, %s169
      %p180 = scmp.eq.s32.totalorder %s24, 0
      %p181 = por %p179, %p180
      %p182 = scmp.ne.s32.totalorder %s168, %s169
      %p183 = scmp.eq.s32.totalorder %s25, 1
      %p184 = por %p182, %p183
      %p186 = scmp.ne.s32.totalorder %s169, %s185
      %p187 = scmp.eq.s32.totalorder %s25, 0
      %p188 = por %p186, %p187
      %p189 = scmp.le.s32.totalorder 1, %s19
      %p190 = scmp.lt.s32.totalorder %s19, 3
      %p191 = pnand %p189, %p190
      %p192 = pneg %p191
      // Predicated region
      $region9: #{tpu_custom_call.1} parent=5 // pred_check
        _
      $region10: #{tpu_custom_call.1} parent=5 // pred_check_branch
        %194 = sbr.rel (%p191) target = $region12
      $region11: #{tpu_custom_call.1} parent=5 // pred_region
        %s195 = ssub.s32 %s19, 1
        // Predicated region
        $region13: #{tpu_custom_call.1} parent=11 // pred_check
          %p196 = pneg %p92
        $region14: #{tpu_custom_call.1} parent=11 // pred_check_branch
          %198 = sbr.rel (%p196) target = $region16
        $region15: #{tpu_custom_call.1} parent=11 // pred_region
          _
        $region16: #{tpu_custom_call.1} parent=11 // pred_fallthru
          _
        // Predicated region
        $region17: #{tpu_custom_call.1} parent=11 // pred_check
          %p199 = pneg %p113
        $region18: #{tpu_custom_call.1} parent=11 // pred_check_branch
          %201 = sbr.rel (%p199) target = $region20
        $region19: #{tpu_custom_call.1} parent=11 // pred_region
          %s203 = ssub.s32 14464, 14464
          %204 = vsyncadd [#allocation6], %s203
          %s205 = sshll.u32 [#allocation5], 4
          %s206 = int_to_ptr.vmem [resolvable:$true] %s205
          %211 = dma.hbm_to_vmem [thread:$0]  %s3, 14464, %s206, [#allocation6], 64, 64, 4
        $region20: #{tpu_custom_call.1} parent=11 // pred_fallthru
          _
        // Predicated region
        $region21: #{tpu_custom_call.1} parent=11 // pred_check
          %p212 = pneg %p134
        $region22: #{tpu_custom_call.1} parent=11 // pred_check_branch
          %214 = sbr.rel (%p212) target = $region24
        $region23: #{tpu_custom_call.1} parent=11 // pred_region
          _
        $region24: #{tpu_custom_call.1} parent=11 // pred_fallthru
          _
        // Predicated region
        $region25: #{tpu_custom_call.1} parent=11 // pred_check
          %p215 = pneg %p155
        $region26: #{tpu_custom_call.1} parent=11 // pred_check_branch
          %217 = sbr.rel (%p215) target = $region28
        $region27: #{tpu_custom_call.1} parent=11 // pred_region
          _
        $region28: #{tpu_custom_call.1} parent=11 // pred_fallthru
          _
      $region12: #{tpu_custom_call.1} parent=5 // pred_fallthru
        _
      %p218 = scmp.lt.s32.totalorder %s19, 2
      // Predicated region
      $region29: #{tpu_custom_call.1} parent=5 // pred_check
        %p219 = pneg %p218
      $region30: #{tpu_custom_call.1} parent=5 // pred_check_branch
        %221 = sbr.rel (%p219) target = $region32
      $region31: #{tpu_custom_call.1} parent=5 // pred_region
        // Predicated region
        $region33: #{tpu_custom_call.1} parent=31 // pred_check
          %p222 = pneg %p39
        $region34: #{tpu_custom_call.1} parent=31 // pred_check_branch
          %224 = sbr.rel (%p222) target = $region36
        $region35: #{tpu_custom_call.1} parent=31 // pred_region
          %s225 = sand.u32 %s29, 1
          %s226 = scalar_lea.sflag [#allocation3], %s225
          %s227 = sand.u32 %s29, 1
          %s228 = smul.addr %s227, 120
          %s229 = scalar_lea.vmem [#allocation2], %s228
          %s231 = ssub.s32 1920, 1920
          %232 = vsyncadd %s226, %s231
          %s233 = smul.addr %s19, 15
          %s234 = smul.addr %s233, 128
          %s235 = scalar_lea.hbm %s0, %s234
          %s237 = sshll.u32 %s229, 4
          %s238 = int_to_ptr.vmem [resolvable:$true] %s237
          %240 = dma.hbm_to_vmem [thread:$0]  %s235, 1920, %s238, %s226
        $region36: #{tpu_custom_call.1} parent=31 // pred_fallthru
          _
        // Predicated region
        $region37: #{tpu_custom_call.1} parent=31 // pred_check
          %p241 = pneg %p65
        $region38: #{tpu_custom_call.1} parent=31 // pred_check_branch
          %243 = sbr.rel (%p241) target = $region40
        $region39: #{tpu_custom_call.1} parent=31 // pred_region
          %s244 = smul.u32 8, %s19
          %p245 = scmp.lt.s32.totalorder %s244, 15
          %s246 = scalar_select %p245, %s244, 15
          %s247 = smul.addr %s246, 8
          %s248 = scalar_lea.vmem %s1, %s247
          %s249 = smul.u32 8, %s19
        $region40: #{tpu_custom_call.1} parent=31 // pred_fallthru
          _
      $region32: #{tpu_custom_call.1} parent=5 // pred_fallthru
        _
      %p250 = scmp.le.s32.totalorder 1, %s19
      %p251 = scmp.lt.s32.totalorder %s19, 3
      %p252 = pnand %p250, %p251
      %p253 = pneg %p252
      // Predicated region
      $region41: #{tpu_custom_call.1} parent=5 // pred_check
        _
      $region42: #{tpu_custom_call.1} parent=5 // pred_check_branch
        %255 = sbr.rel (%p252) target = $region44
      $region43: #{tpu_custom_call.1} parent=5 // pred_region
        %s256 = ssub.s32 %s19, 1
        %s257 = sand.u32 %s32, 1
        %s258 = scalar_lea.sflag [#allocation3], %s257
        %s259 = sand.u32 %s32, 1
        %s260 = smul.addr %s259, 120
        %s261 = scalar_lea.vmem [#allocation2], %s260
        // Predicated region
        $region45: #{tpu_custom_call.1} parent=43 // pred_check
          %p262 = pneg %p45
        $region46: #{tpu_custom_call.1} parent=43 // pred_check_branch
          %264 = sbr.rel (%p262) target = $region48
        $region47: #{tpu_custom_call.1} parent=43 // pred_region
          %265 = dma.done %s258, 1920
        $region48: #{tpu_custom_call.1} parent=43 // pred_fallthru
          _
        // Predicated region
        $region49: #{tpu_custom_call.1} parent=43 // pred_check
          %p266 = pneg %p113
        $region50: #{tpu_custom_call.1} parent=43 // pred_check_branch
          %268 = sbr.rel (%p266) target = $region52
        $region51: #{tpu_custom_call.1} parent=43 // pred_region
          %269 = dma.done [#allocation6], 14464
        $region52: #{tpu_custom_call.1} parent=43 // pred_fallthru
          _
        %s270 = sand.u32 %s32, 1
        %s271 = scalar_lea.sflag [#allocation3], %s270
        %s272 = sand.u32 %s32, 1
        %s273 = smul.addr %s272, 120
        %s274 = scalar_lea.vmem [#allocation2], %s273
        %p275 = pneg %p45
        %p276 = pneg %p42
        %s277 = smul.u32 8, %s24
        %p278 = scmp.lt.s32.totalorder %s277, 15
        %s279 = scalar_select %p278, %s277, 15
        %s280 = smul.addr %s279, 8
        %s281 = scalar_lea.vmem %s1, %s280
        %p282 = pneg %p71
        %p283 = pneg %p68
        %p284 = pneg %p92
        %p285 = pneg %p89
        %p286 = pneg %p113
        %p287 = pneg %p110
        %p288 = pneg %p134
        %p289 = pneg %p131
        %p290 = pneg %p155
        %p291 = pneg %p152
        %p292 = pneg %p181
        %p293 = pneg %p178
        %s294 = sand.u32 %s168, 1
        %s295 = scalar_lea.sflag [#allocation4], %s294
        %s296 = sand.u32 %s168, 1
        %s297 = smul.addr %s296, 8
        %s298 = scalar_lea.vmem [#allocation7], %s297
        %s299 = smul.u32 8, %s24
        %p300 = scmp.lt.s32.totalorder %s299, 15
        %s301 = scalar_select %p300, %s299, 15
        %s302 = smul.addr %s301, 8
        %s303 = scalar_lea.vmem %s1, %s302
        %s304 = smul.u32 8, %s24
        %v306 = vld [vmem:[%s303] sm:$0xff]
        %v307 = vld [vmem:[%s303 + $0x8] sm:$0xff]
        %v308 = vld [vmem:[%s303 + $0x10] sm:$0xff]
        %v309 = vld [vmem:[%s303 + $0x18] sm:$0xff]
        %v310 = vld [vmem:[%s303 + $0x20] sm:$0xff]
        %v311 = vld [vmem:[%s303 + $0x28] sm:$0xff]
        %v312 = vld [vmem:[%s303 + $0x30] sm:$0xff]
        %v313 = vld [vmem:[%s303 + $0x38] sm:$0xff]
        %v314 = vld [vmem:[%s2] sm:$0x1f]
        %vm315 = vcmask 39936
        %v317 = vsel %vm315, %v306, 0
        %v320 = vsel %vm315, %v307, 0
        %v323 = vsel %vm315, %v308, 0
        %v326 = vsel %vm315, %v309, 0
        %v329 = vsel %vm315, %v310, 0
        %v332 = vsel %vm315, %v311, 0
        %v335 = vsel %vm315, %v312, 0
        %v338 = vsel %vm315, %v313, 0
        %vm340 = vcmask 1044480
        %v342 = vsel %vm340, %v314, 0
        %344 = vmatprep.subr.mxu0 0.0
        %345 = vmatpush1.msra.mxu0 %v342
        %346 = vmatprep.subr.mxu0 0.0
        %347 = vmatpush1.msra.mxu0 0.0
        %348 = vmatprep.subr.mxu0 0.0
        %349 = vmatpush1.msra.mxu0 0.0
        %350 = vmatprep.subr.mxu0 0.0
        %351 = vmatpush1.msra.mxu0 0.0
        %352 = vmatprep.subr.mxu0 0.0
        %353 = vmatpush1.msra.mxu0 0.0
        %354 = vmatprep.subr.mxu0 0.0
        %355 = vmatpush1.msra.mxu0 0.0
        %356 = vmatprep.subr.mxu0 0.0
        %357 = vmatpush1.msra.mxu0 0.0
        %358 = vmatprep.subr.mxu0 0.0
        %359 = vmatpush1.msra.mxu0 0.0
        %360 = vmatprep.subr.mxu0 0.0
        %361 = vmatpush1.msra.mxu0 0.0
        %362 = vmatprep.subr.mxu0 0.0
        %363 = vmatpush1.msra.mxu0 0.0
        %364 = vmatprep.subr.mxu0 0.0
        %365 = vmatpush1.msra.mxu0 0.0
        %366 = vmatprep.subr.mxu0 0.0
        %367 = vmatpush1.msra.mxu0 0.0
        %368 = vmatprep.subr.mxu0 0.0
        %369 = vmatpush1.msra.mxu0 0.0
        %370 = vmatprep.subr.mxu0 0.0
        %371 = vmatpush1.msra.mxu0 0.0
        %372 = vmatprep.subr.mxu0 0.0
        %373 = vmatpush1.msra.mxu0 0.0
        %374 = vmatprep.subr.mxu0 0.0
        %375 = vmatpush1.msra.mxu0 0.0
        %376 = vmatprep.subr.mxu0 0.0
        %377 = vmatpush1.msra.mxu0 0.0
        %378 = vmatprep.subr.mxu0 0.0
        %379 = vmatpush1.msra.mxu0 0.0
        %380 = vmatprep.subr.mxu0 0.0
        %381 = vmatpush1.msra.mxu0 0.0
        %382 = vmatprep.subr.mxu0 0.0
        %383 = vmatpush1.msra.mxu0 0.0
        %384 = vmatprep.subr.mxu0 0.0
        %385 = vmatpush1.msra.mxu0 0.0
        %386 = vmatprep.subr.mxu0 0.0
        %387 = vmatpush1.msra.mxu0 0.0
        %388 = vmatprep.subr.mxu0 0.0
        %389 = vmatpush1.msra.mxu0 0.0
        %390 = vmatprep.subr.mxu0 0.0
        %391 = vmatpush1.msra.mxu0 0.0
        %392 = vmatprep.subr.mxu0 0.0
        %393 = vmatpush1.msra.mxu0 0.0
        %394 = vmatprep.subr.mxu0 0.0
        %395 = vmatpush1.msra.mxu0 0.0
        %396 = vmatprep.subr.mxu0 0.0
        %397 = vmatpush1.msra.mxu0 0.0
        %398 = vmatprep.subr.mxu0 0.0
        %399 = vmatpush1.msra.mxu0 0.0
        %400 = vmatprep.subr.mxu0 0.0
        %401 = vmatpush1.msra.mxu0 0.0
        %402 = vmatprep.subr.mxu0 0.0
        %403 = vmatpush1.msra.mxu0 0.0
        %404 = vmatprep.subr.mxu0 0.0
        %405 = vmatpush1.msra.mxu0 0.0
        %406 = vmatprep.subr.mxu0 0.0
        %407 = vmatpush1.msra.mxu0 0.0
        %408 = vmatprep.mubr.f32.mxu0 0.0
        %409 = vmatmul.mubr.f32.gmra.mrb[0].mxu0 %v317
        %v410 = vpop.f32.mrb[0].mxu0
        %v411 = vadd.f32 0.0, %v410
        %v412 = vpop.f32.mrb[0].mxu0
        %413 = vmatprep.mubr.f32.mxu0 0.0
        %414 = vmatmul.mubr.f32.gmra.mrb[0].mxu0 %v320
        %v415 = vpop.f32.mrb[0].mxu0
        %v416 = vadd.f32 0.0, %v415
        %v417 = vpop.f32.mrb[0].mxu0
        %418 = vmatprep.mubr.f32.mxu0 0.0
        %419 = vmatmul.mubr.f32.gmra.mrb[0].mxu0 %v323
        %v420 = vpop.f32.mrb[0].mxu0
        %v421 = vadd.f32 0.0, %v420
        %v422 = vpop.f32.mrb[0].mxu0
        %423 = vmatprep.mubr.f32.mxu0 0.0
        %424 = vmatmul.mubr.f32.gmra.mrb[0].mxu0 %v326
        %v425 = vpop.f32.mrb[0].mxu0
        %v426 = vadd.f32 0.0, %v425
        %v427 = vpop.f32.mrb[0].mxu0
        %428 = vmatprep.mubr.f32.mxu0 0.0
        %429 = vmatmul.mubr.f32.gmra.mrb[0].mxu0 %v329
        %v430 = vpop.f32.mrb[0].mxu0
        %v431 = vadd.f32 0.0, %v430
        %v432 = vpop.f32.mrb[0].mxu0
        %433 = vmatprep.mubr.f32.mxu0 0.0
        %434 = vmatmul.mubr.f32.gmra.mrb[0].mxu0 %v332
        %v435 = vpop.f32.mrb[0].mxu0
        %v436 = vadd.f32 0.0, %v435
        %v437 = vpop.f32.mrb[0].mxu0
        %438 = vmatprep.mubr.f32.mxu0 0.0
        %439 = vmatmul.mubr.f32.gmra.mrb[0].mxu0 %v335
        %v440 = vpop.f32.mrb[0].mxu0
        %v441 = vadd.f32 0.0, %v440
        %v442 = vpop.f32.mrb[0].mxu0
        %443 = vmatprep.mubr.f32.mxu0 0.0
        %444 = vmatmul.mubr.f32.gmra.mrb[0].mxu0 %v338
        %v445 = vpop.f32.mrb[0].mxu0
        %v446 = vadd.f32 0.0, %v445
        %v447 = vpop.f32.mrb[0].mxu0
        %448 = vdwg.mxu0
        %v449 = vrot.slane %v411, 4
        %v450 = vmax.f32 %v411, %v449
        %v451 = vrot.slane %v450, 2
        %v452 = vmax.f32 %v450, %v451
        %v453 = vrot.slane %v452, 1
        %v454 = vmax.f32 %v452, %v453
        %v455 = vrot.slane %v416, 4
        %v456 = vmax.f32 %v416, %v455
        %v457 = vrot.slane %v456, 2
        %v458 = vmax.f32 %v456, %v457
        %v459 = vrot.slane %v458, 1
        %v460 = vmax.f32 %v458, %v459
        %v461 = vrot.slane %v421, 4
        %v462 = vmax.f32 %v421, %v461
        %v463 = vrot.slane %v462, 2
        %v464 = vmax.f32 %v462, %v463
        %v465 = vrot.slane %v464, 1
        %v466 = vmax.f32 %v464, %v465
        %v467 = vrot.slane %v426, 4
        %v468 = vmax.f32 %v426, %v467
        %v469 = vrot.slane %v468, 2
        %v470 = vmax.f32 %v468, %v469
        %v471 = vrot.slane %v470, 1
        %v472 = vmax.f32 %v470, %v471
        %v473 = vrot.slane %v431, 4
        %v474 = vmax.f32 %v431, %v473
        %v475 = vrot.slane %v474, 2
        %v476 = vmax.f32 %v474, %v475
        %v477 = vrot.slane %v476, 1
        %v478 = vmax.f32 %v476, %v477
        %v479 = vrot.slane %v436, 4
        %v480 = vmax.f32 %v436, %v479
        %v481 = vrot.slane %v480, 2
        %v482 = vmax.f32 %v480, %v481
        %v483 = vrot.slane %v482, 1
        %v484 = vmax.f32 %v482, %v483
        %v485 = vrot.slane %v441, 4
        %v486 = vmax.f32 %v441, %v485
        %v487 = vrot.slane %v486, 2
        %v488 = vmax.f32 %v486, %v487
        %v489 = vrot.slane %v488, 1
        %v490 = vmax.f32 %v488, %v489
        %v491 = vrot.slane %v446, 4
        %v492 = vmax.f32 %v446, %v491
        %v493 = vrot.slane %v492, 2
        %v494 = vmax.f32 %v492, %v493
        %v495 = vrot.slane %v494, 1
        %v496 = vmax.f32 %v494, %v495
        %v497 = vld [vmem:[%s261] sm:$0xff]
        %v498 = vld [vmem:[%s261 + $0x8] sm:$0xff]
        %v499 = vld [vmem:[%s261 + $0x10] sm:$0xff]
        %v500 = vld [vmem:[%s261 + $0x18] sm:$0xff]
        %v501 = vld [vmem:[%s261 + $0x20] sm:$0xff]
        %v502 = vld [vmem:[%s261 + $0x28] sm:$0xff]
        %v503 = vld [vmem:[%s261 + $0x30] sm:$0xff]
        %v504 = vld [vmem:[%s261 + $0x38] sm:$0xff]
        %v505 = vld [vmem:[%s261 + $0x40] sm:$0xff]
        %v506 = vld [vmem:[%s261 + $0x48] sm:$0xff]
        %v507 = vld [vmem:[%s261 + $0x50] sm:$0xff]
        %v508 = vld [vmem:[%s261 + $0x58] sm:$0xff]
        %v509 = vld [vmem:[%s261 + $0x60] sm:$0xff]
        %v510 = vld [vmem:[%s261 + $0x68] sm:$0xff]
        %v511 = vld [vmem:[%s261 + $0x70] sm:$0xff]
        %v512 = vpack.c.bf16 %v497, %v497
        %v513 = vpack.c.bf16 %v498, %v498
        %v514 = vpack.c.bf16 %v499, %v499
        %v515 = vpack.c.bf16 %v500, %v500
        %v516 = vpack.c.bf16 %v501, %v501
        %v517 = vpack.c.bf16 %v502, %v502
        %v518 = vpack.c.bf16 %v503, %v503
        %v519 = vpack.c.bf16 %v504, %v504
        %v520 = vpack.c.bf16 %v505, %v505
        %v521 = vpack.c.bf16 %v506, %v506
        %v522 = vpack.c.bf16 %v507, %v507
        %v523 = vpack.c.bf16 %v508, %v508
        %v524 = vpack.c.bf16 %v509, %v509
        %v525 = vpack.c.bf16 %v510, %v510
        %v526 = vpack.c.bf16 %v511, %v511
        %v527 = vld [vmem:[#allocation5] sm:$0xf]
        %v528 = vld [vmem:[#allocation5 + $0x4] sm:$0xf]
        %v529 = vld [vmem:[#allocation5 + $0x8] sm:$0xf]
        %v530 = vld [vmem:[#allocation5 + $0xc] sm:$0xf]
        %v531 = vld [vmem:[#allocation5 + $0x10] sm:$0xf]
        %v532 = vld [vmem:[#allocation5 + $0x14] sm:$0xf]
        %v533 = vld [vmem:[#allocation5 + $0x18] sm:$0xf]
        %v534 = vld [vmem:[#allocation5 + $0x1c] sm:$0xf]
        %v535 = vld [vmem:[#allocation5 + $0x20] sm:$0xf]
        %v536 = vld [vmem:[#allocation5 + $0x24] sm:$0xf]
        %v537 = vld [vmem:[#allocation5 + $0x28] sm:$0xf]
        %v538 = vld [vmem:[#allocation5 + $0x2c] sm:$0xf]
        %v539 = vld [vmem:[#allocation5 + $0x30] sm:$0xf]
        %v540 = vld [vmem:[#allocation5 + $0x34] sm:$0xf]
        %v541 = vld [vmem:[#allocation5 + $0x38] sm:$0xf]
        %v542 = vld [vmem:[#allocation5 + $0x3c] sm:$0xf]
        %v543 = vld [vmem:[#allocation5 + $0x40] sm:$0xf]
        %v544 = vld [vmem:[#allocation5 + $0x44] sm:$0xf]
        %v545 = vld [vmem:[#allocation5 + $0x48] sm:$0xf]
        %v546 = vld [vmem:[#allocation5 + $0x4c] sm:$0xf]
        %v547 = vld [vmem:[#allocation5 + $0x50] sm:$0xf]
        %v548 = vld [vmem:[#allocation5 + $0x54] sm:$0xf]
        %v549 = vld [vmem:[#allocation5 + $0x58] sm:$0xf]
        %v550 = vld [vmem:[#allocation5 + $0x5c] sm:$0xf]
        %v551 = vld [vmem:[#allocation5 + $0x60] sm:$0xf]
        %v552 = vld [vmem:[#allocation5 + $0x64] sm:$0xf]
        %v553 = vld [vmem:[#allocation5 + $0x68] sm:$0xf]
        %v554 = vld [vmem:[#allocation5 + $0x6c] sm:$0xf]
        %v555 = vld [vmem:[#allocation5 + $0x70] sm:$0xf]
        %v556 = vld [vmem:[#allocation5 + $0x74] sm:$0xf]
        %v557 = vld [vmem:[#allocation5 + $0x78] sm:$0xf]
        %v558 = vld [vmem:[#allocation5 + $0x7c] sm:$0xf]
        %v559 = vld [vmem:[#allocation5 + $0x80] sm:$0xf]
        %v560 = vld [vmem:[#allocation5 + $0x84] sm:$0xf]
        %v561 = vld [vmem:[#allocation5 + $0x88] sm:$0xf]
        %v562 = vld [vmem:[#allocation5 + $0x8c] sm:$0xf]
        %v563 = vld [vmem:[#allocation5 + $0x90] sm:$0xf]
        %v564 = vld [vmem:[#allocation5 + $0x94] sm:$0xf]
        %v565 = vld [vmem:[#allocation5 + $0x98] sm:$0xf]
        %v566 = vld [vmem:[#allocation5 + $0x9c] sm:$0xf]
        %v567 = vld [vmem:[#allocation5 + $0xa0] sm:$0xf]
        %v568 = vld [vmem:[#allocation5 + $0xa4] sm:$0xf]
        %v569 = vld [vmem:[#allocation5 + $0xa8] sm:$0xf]
        %v570 = vld [vmem:[#allocation5 + $0xac] sm:$0xf]
        %v571 = vld [vmem:[#allocation5 + $0xb0] sm:$0xf]
        %v572 = vld [vmem:[#allocation5 + $0xb4] sm:$0xf]
        %v573 = vld [vmem:[#allocation5 + $0xb8] sm:$0xf]
        %v574 = vld [vmem:[#allocation5 + $0xbc] sm:$0xf]
        %v575 = vld [vmem:[#allocation5 + $0xc0] sm:$0xf]
        %v576 = vld [vmem:[#allocation5 + $0xc4] sm:$0xf]
        %v577 = vld [vmem:[#allocation5 + $0xc8] sm:$0xf]
        %v578 = vld [vmem:[#allocation5 + $0xcc] sm:$0xf]
        %v579 = vld [vmem:[#allocation5 + $0xd0] sm:$0xf]
        %v580 = vld [vmem:[#allocation5 + $0xd4] sm:$0xf]
        %v581 = vld [vmem:[#allocation5 + $0xd8] sm:$0xf]
        %v582 = vld [vmem:[#allocation5 + $0xdc] sm:$0xf]
        %v583 = vld [vmem:[#allocation5 + $0xe0] sm:$0xf]
        %v584 = vld [vmem:[#allocation5 + $0xe4] sm:$0xf]
        %v585 = vld [vmem:[#allocation5 + $0xe8] sm:$0xf]
        %v586 = vld [vmem:[#allocation5 + $0xec] sm:$0xf]
        %v587 = vld [vmem:[#allocation5 + $0xf0] sm:$0xf]
        %v588 = vld [vmem:[#allocation5 + $0xf4] sm:$0xf]
        %v589 = vld [vmem:[#allocation5 + $0xf8] sm:$0xf]
        %v590 = vld [vmem:[#allocation5 + $0xfc] sm:$0xf]
        %v591 = vld [vmem:[#allocation5 + $0x100] sm:$0xf]
        %v592 = vld [vmem:[#allocation5 + $0x104] sm:$0xf]
        %v593 = vld [vmem:[#allocation5 + $0x108] sm:$0xf]
        %v594 = vld [vmem:[#allocation5 + $0x10c] sm:$0xf]
        %v595 = vld [vmem:[#allocation5 + $0x110] sm:$0xf]
        %v596 = vld [vmem:[#allocation5 + $0x114] sm:$0xf]
        %v597 = vld [vmem:[#allocation5 + $0x118] sm:$0xf]
        %v598 = vld [vmem:[#allocation5 + $0x11c] sm:$0xf]
        %v599 = vld [vmem:[#allocation5 + $0x120] sm:$0xf]
        %v600 = vld [vmem:[#allocation5 + $0x124] sm:$0xf]
        %v601 = vld [vmem:[#allocation5 + $0x128] sm:$0xf]
        %v602 = vld [vmem:[#allocation5 + $0x12c] sm:$0xf]
        %v603 = vld [vmem:[#allocation5 + $0x130] sm:$0xf]
        %v604 = vld [vmem:[#allocation5 + $0x134] sm:$0xf]
        %v605 = vld [vmem:[#allocation5 + $0x138] sm:$0xf]
        %v606 = vld [vmem:[#allocation5 + $0x13c] sm:$0xf]
        %v607 = vld [vmem:[#allocation5 + $0x140] sm:$0xf]
        %v608 = vld [vmem:[#allocation5 + $0x144] sm:$0xf]
        %v609 = vld [vmem:[#allocation5 + $0x148] sm:$0xf]
        %v610 = vld [vmem:[#allocation5 + $0x14c] sm:$0xf]
        %v611 = vld [vmem:[#allocation5 + $0x150] sm:$0xf]
        %v612 = vld [vmem:[#allocation5 + $0x154] sm:$0xf]
        %v613 = vld [vmem:[#allocation5 + $0x158] sm:$0xf]
        %v614 = vld [vmem:[#allocation5 + $0x15c] sm:$0xf]
        %v615 = vld [vmem:[#allocation5 + $0x160] sm:$0xf]
        %v616 = vld [vmem:[#allocation5 + $0x164] sm:$0xf]
        %v617 = vld [vmem:[#allocation5 + $0x168] sm:$0xf]
        %v618 = vld [vmem:[#allocation5 + $0x16c] sm:$0xf]
        %v619 = vld [vmem:[#allocation5 + $0x170] sm:$0xf]
        %v620 = vld [vmem:[#allocation5 + $0x174] sm:$0xf]
        %v621 = vld [vmem:[#allocation5 + $0x178] sm:$0xf]
        %v622 = vld [vmem:[#allocation5 + $0x17c] sm:$0xf]
        %v623 = vld [vmem:[#allocation5 + $0x180] sm:$0xf]
        %v624 = vld [vmem:[#allocation5 + $0x184] sm:$0xf]
        %v625 = vld [vmem:[#allocation5 + $0x188] sm:$0xf]
        %v626 = vld [vmem:[#allocation5 + $0x18c] sm:$0xf]
        %v627 = vld [vmem:[#allocation5 + $0x190] sm:$0xf]
        %v628 = vld [vmem:[#allocation5 + $0x194] sm:$0xf]
        %v629 = vld [vmem:[#allocation5 + $0x198] sm:$0xf]
        %v630 = vld [vmem:[#allocation5 + $0x19c] sm:$0xf]
        %v631 = vld [vmem:[#allocation5 + $0x1a0] sm:$0xf]
        %v632 = vld [vmem:[#allocation5 + $0x1a4] sm:$0xf]
        %v633 = vld [vmem:[#allocation5 + $0x1a8] sm:$0xf]
        %v634 = vld [vmem:[#allocation5 + $0x1ac] sm:$0xf]
        %v635 = vld [vmem:[#allocation5 + $0x1b0] sm:$0xf]
        %v636 = vld [vmem:[#allocation5 + $0x1b4] sm:$0xf]
        %v637 = vld [vmem:[#allocation5 + $0x1b8] sm:$0xf]
        %v638 = vld [vmem:[#allocation5 + $0x1bc] sm:$0xf]
        %v639 = vld [vmem:[#allocation5 + $0x1c0] sm:$0xf]
        %v640 = vld [vmem:[#allocation5 + $0x1c4] sm:$0xf]
        %v641 = vld [vmem:[#allocation5 + $0x1c8] sm:$0xf]
        %v642 = vld [vmem:[#allocation5 + $0x1cc] sm:$0xf]
        %v643 = vld [vmem:[#allocation5 + $0x1d0] sm:$0xf]
        %v644 = vld [vmem:[#allocation5 + $0x1d4] sm:$0xf]
        %v645 = vld [vmem:[#allocation5 + $0x1d8] sm:$0xf]
        %v646 = vld [vmem:[#allocation5 + $0x1dc] sm:$0xf]
        %v647 = vld [vmem:[#allocation5 + $0x1e0] sm:$0xf]
        %v648 = vld [vmem:[#allocation5 + $0x1e4] sm:$0xf]
        %v649 = vld [vmem:[#allocation5 + $0x1e8] sm:$0xf]
        %v650 = vld [vmem:[#allocation5 + $0x1ec] sm:$0xf]
        %v651 = vld [vmem:[#allocation5 + $0x1f0] sm:$0xf]
        %v652 = vld [vmem:[#allocation5 + $0x1f4] sm:$0xf]
        %v653 = vld [vmem:[#allocation5 + $0x1f8] sm:$0xf]
        %v654 = vld [vmem:[#allocation5 + $0x1fc] sm:$0xf]
        %v655 = vld [vmem:[#allocation5 + $0x200] sm:$0xf]
        %v656 = vld [vmem:[#allocation5 + $0x204] sm:$0xf]
        %v657 = vld [vmem:[#allocation5 + $0x208] sm:$0xf]
        %v658 = vld [vmem:[#allocation5 + $0x20c] sm:$0xf]
        %v659 = vld [vmem:[#allocation5 + $0x210] sm:$0xf]
        %v660 = vld [vmem:[#allocation5 + $0x214] sm:$0xf]
        %v661 = vld [vmem:[#allocation5 + $0x218] sm:$0xf]
        %v662 = vld [vmem:[#allocation5 + $0x21c] sm:$0xf]
        %v663 = vld [vmem:[#allocation5 + $0x220] sm:$0xf]
        %v664 = vld [vmem:[#allocation5 + $0x224] sm:$0xf]
        %v665 = vld [vmem:[#allocation5 + $0x228] sm:$0xf]
        %v666 = vld [vmem:[#allocation5 + $0x22c] sm:$0xf]
        %v667 = vld [vmem:[#allocation5 + $0x230] sm:$0xf]
        %v668 = vld [vmem:[#allocation5 + $0x234] sm:$0xf]
        %v669 = vld [vmem:[#allocation5 + $0x238] sm:$0xf]
        %v670 = vld [vmem:[#allocation5 + $0x23c] sm:$0xf]
        %v671 = vld [vmem:[#allocation5 + $0x240] sm:$0xf]
        %v672 = vld [vmem:[#allocation5 + $0x244] sm:$0xf]
        %v673 = vld [vmem:[#allocation5 + $0x248] sm:$0xf]
        %v674 = vld [vmem:[#allocation5 + $0x24c] sm:$0xf]
        %v675 = vld [vmem:[#allocation5 + $0x250] sm:$0xf]
        %v676 = vld [vmem:[#allocation5 + $0x254] sm:$0xf]
        %v677 = vld [vmem:[#allocation5 + $0x258] sm:$0xf]
        %v678 = vld [vmem:[#allocation5 + $0x25c] sm:$0xf]
        %v679 = vld [vmem:[#allocation5 + $0x260] sm:$0xf]
        %v680 = vld [vmem:[#allocation5 + $0x264] sm:$0xf]
        %v681 = vld [vmem:[#allocation5 + $0x268] sm:$0xf]
        %v682 = vld [vmem:[#allocation5 + $0x26c] sm:$0xf]
        %v683 = vld [vmem:[#allocation5 + $0x270] sm:$0xf]
        %v684 = vld [vmem:[#allocation5 + $0x274] sm:$0xf]
        %v685 = vld [vmem:[#allocation5 + $0x278] sm:$0xf]
        %v686 = vld [vmem:[#allocation5 + $0x27c] sm:$0xf]
        %v687 = vld [vmem:[#allocation5 + $0x280] sm:$0xf]
        %v688 = vld [vmem:[#allocation5 + $0x284] sm:$0xf]
        %v689 = vld [vmem:[#allocation5 + $0x288] sm:$0xf]
        %v690 = vld [vmem:[#allocation5 + $0x28c] sm:$0xf]
        %v691 = vld [vmem:[#allocation5 + $0x290] sm:$0xf]
        %v692 = vld [vmem:[#allocation5 + $0x294] sm:$0xf]
        %v693 = vld [vmem:[#allocation5 + $0x298] sm:$0xf]
        %v694 = vld [vmem:[#allocation5 + $0x29c] sm:$0xf]
        %v695 = vld [vmem:[#allocation5 + $0x2a0] sm:$0xf]
        %v696 = vld [vmem:[#allocation5 + $0x2a4] sm:$0xf]
        %v697 = vld [vmem:[#allocation5 + $0x2a8] sm:$0xf]
        %v698 = vld [vmem:[#allocation5 + $0x2ac] sm:$0xf]
        %v699 = vld [vmem:[#allocation5 + $0x2b0] sm:$0xf]
        %v700 = vld [vmem:[#allocation5 + $0x2b4] sm:$0xf]
        %v701 = vld [vmem:[#allocation5 + $0x2b8] sm:$0xf]
        %v702 = vld [vmem:[#allocation5 + $0x2bc] sm:$0xf]
        %v703 = vld [vmem:[#allocation5 + $0x2c0] sm:$0xf]
        %v704 = vld [vmem:[#allocation5 + $0x2c4] sm:$0xf]
        %v705 = vld [vmem:[#allocation5 + $0x2c8] sm:$0xf]
        %v706 = vld [vmem:[#allocation5 + $0x2cc] sm:$0xf]
        %v707 = vld [vmem:[#allocation5 + $0x2d0] sm:$0xf]
        %v708 = vld [vmem:[#allocation5 + $0x2d4] sm:$0xf]
        %v709 = vld [vmem:[#allocation5 + $0x2d8] sm:$0xf]
        %v710 = vld [vmem:[#allocation5 + $0x2dc] sm:$0xf]
        %v711 = vld [vmem:[#allocation5 + $0x2e0] sm:$0xf]
        %v712 = vld [vmem:[#allocation5 + $0x2e4] sm:$0xf]
        %v713 = vld [vmem:[#allocation5 + $0x2e8] sm:$0xf]
        %v714 = vld [vmem:[#allocation5 + $0x2ec] sm:$0xf]
        %v715 = vld [vmem:[#allocation5 + $0x2f0] sm:$0xf]
        %v716 = vld [vmem:[#allocation5 + $0x2f4] sm:$0xf]
        %v717 = vld [vmem:[#allocation5 + $0x2f8] sm:$0xf]
        %v718 = vld [vmem:[#allocation5 + $0x2fc] sm:$0xf]
        %v719 = vld [vmem:[#allocation5 + $0x300] sm:$0xf]
        %v720 = vld [vmem:[#allocation5 + $0x304] sm:$0xf]
        %v721 = vld [vmem:[#allocation5 + $0x308] sm:$0xf]
        %v722 = vld [vmem:[#allocation5 + $0x30c] sm:$0xf]
        %v723 = vld [vmem:[#allocation5 + $0x310] sm:$0xf]
        %v724 = vld [vmem:[#allocation5 + $0x314] sm:$0xf]
        %v725 = vld [vmem:[#allocation5 + $0x318] sm:$0xf]
        %v726 = vld [vmem:[#allocation5 + $0x31c] sm:$0xf]
        %v727 = vld [vmem:[#allocation5 + $0x320] sm:$0xf]
        %v728 = vld [vmem:[#allocation5 + $0x324] sm:$0xf]
        %v729 = vld [vmem:[#allocation5 + $0x328] sm:$0xf]
        %v730 = vld [vmem:[#allocation5 + $0x32c] sm:$0xf]
        %v731 = vld [vmem:[#allocation5 + $0x330] sm:$0xf]
        %v732 = vld [vmem:[#allocation5 + $0x334] sm:$0xf]
        %v733 = vld [vmem:[#allocation5 + $0x338] sm:$0xf]
        %v734 = vld [vmem:[#allocation5 + $0x33c] sm:$0xf]
        %v735 = vld [vmem:[#allocation5 + $0x340] sm:$0xf]
        %v736 = vld [vmem:[#allocation5 + $0x344] sm:$0xf]
        %v737 = vld [vmem:[#allocation5 + $0x348] sm:$0xf]
        %v738 = vld [vmem:[#allocation5 + $0x34c] sm:$0xf]
        %v739 = vld [vmem:[#allocation5 + $0x350] sm:$0xf]
        %v740 = vld [vmem:[#allocation5 + $0x354] sm:$0xf]
        %v741 = vld [vmem:[#allocation5 + $0x358] sm:$0xf]
        %v742 = vld [vmem:[#allocation5 + $0x35c] sm:$0xf]
        %v743 = vld [vmem:[#allocation5 + $0x360] sm:$0xf]
        %v744 = vld [vmem:[#allocation5 + $0x364] sm:$0xf]
        %v745 = vld [vmem:[#allocation5 + $0x368] sm:$0xf]
        %v746 = vld [vmem:[#allocation5 + $0x36c] sm:$0xf]
        %v747 = vld [vmem:[#allocation5 + $0x370] sm:$0xf]
        %v748 = vld [vmem:[#allocation5 + $0x374] sm:$0xf]
        %v749 = vld [vmem:[#allocation5 + $0x378] sm:$0xf]
        %v750 = vld [vmem:[#allocation5 + $0x37c] sm:$0xf]
        %v751 = vld [vmem:[#allocation5 + $0x380] sm:$0xf]
        %v752 = vld [vmem:[#allocation5 + $0x384] sm:$0xf]
        %v753 = vld [vmem:[%s4] sm:$0xff]
        %v754 = vld [vmem:[%s4 + $0x8] sm:$0xff]
        %v755 = vld [vmem:[%s4 + $0x10] sm:$0xff]
        %v756 = vld [vmem:[%s4 + $0x18] sm:$0xff]
        %v757 = vld [vmem:[%s4 + $0x20] sm:$0xff]
        %v758 = vld [vmem:[%s4 + $0x28] sm:$0xff]
        %v759 = vld [vmem:[%s4 + $0x30] sm:$0xff]
        %v760 = vld [vmem:[%s4 + $0x38] sm:$0xff]
        %v761 = vld [vmem:[%s4 + $0x40] sm:$0xff]
        %v762 = vld [vmem:[%s4 + $0x48] sm:$0xff]
        %v763 = vld [vmem:[%s4 + $0x50] sm:$0xff]
        %v764 = vld [vmem:[%s4 + $0x58] sm:$0xff]
        %v765 = vld [vmem:[%s4 + $0x60] sm:$0xff]
        %v766 = vld [vmem:[%s4 + $0x68] sm:$0xff]
        %v767 = vld [vmem:[%s4 + $0x70] sm:$0xff]
        %v768 = vld [vmem:[%s4 + $0x78] sm:$0xff]
        %vm777 = vcmask 1041409
        %v778 = vsel %vm777, %v460, %v454
        %vm779 = vcmask 1042434
        %v780 = vsel %vm779, %v466, %v778
        %vm781 = vcmask 1043459
        %v782 = vsel %vm781, %v472, %v780
        %vm783 = vcmask 1044484
        %v784 = vsel %vm783, %v478, %v782
        %vm785 = vcmask 1045509
        %v786 = vsel %vm785, %v484, %v784
        %vm787 = vcmask 1046534
        %v788 = vsel %vm787, %v490, %v786
        %vm789 = vcmask 1047559
        %v790 = vsel %vm789, %v496, %v788
        %792 = vmatprep.subr.mxu0 0.0
        %793 = vmatpush1.msra.mxu0 %v753
        %794 = vmatprep.subr.mxu0 0.0
        %795 = vmatpush1.msra.mxu0 %v754
        %796 = vmatprep.subr.mxu0 0.0
        %797 = vmatpush1.msra.mxu0 %v755
        %798 = vmatprep.subr.mxu0 0.0
        %799 = vmatpush1.msra.mxu0 %v756
        %800 = vmatprep.subr.mxu0 0.0
        %801 = vmatpush1.msra.mxu0 %v757
        %802 = vmatprep.subr.mxu0 0.0
        %803 = vmatpush1.msra.mxu0 %v758
        %804 = vmatprep.subr.mxu0 0.0
        %805 = vmatpush1.msra.mxu0 %v759
        %806 = vmatprep.subr.mxu0 0.0
        %807 = vmatpush1.msra.mxu0 %v760
        %808 = vmatprep.subr.mxu0 0.0
        %809 = vmatpush1.msra.mxu0 %v761
        %810 = vmatprep.subr.mxu0 0.0
        %811 = vmatpush1.msra.mxu0 %v762
        %812 = vmatprep.subr.mxu0 0.0
        %813 = vmatpush1.msra.mxu0 %v763
        %814 = vmatprep.subr.mxu0 0.0
        %815 = vmatpush1.msra.mxu0 %v764
        %816 = vmatprep.subr.mxu0 0.0
        %817 = vmatpush1.msra.mxu0 %v765
        %818 = vmatprep.subr.mxu0 0.0
        %819 = vmatpush1.msra.mxu0 %v766
        %820 = vmatprep.subr.mxu0 0.0
        %821 = vmatpush1.msra.mxu0 %v767
        %822 = vmatprep.subr.mxu0 0.0
        %823 = vmatpush1.msra.mxu0 %v768
        %824 = vmatprep.subr.mxu0 0.0
        %825 = vmatpush1.msra.mxu0 0.0
        %826 = vmatprep.subr.mxu0 0.0
        %827 = vmatpush1.msra.mxu0 0.0
        %828 = vmatprep.subr.mxu0 0.0
        %829 = vmatpush1.msra.mxu0 0.0
        %830 = vmatprep.subr.mxu0 0.0
        %831 = vmatpush1.msra.mxu0 0.0
        %832 = vmatprep.subr.mxu0 0.0
        %833 = vmatpush1.msra.mxu0 0.0
        %834 = vmatprep.subr.mxu0 0.0
        %835 = vmatpush1.msra.mxu0 0.0
        %836 = vmatprep.subr.mxu0 0.0
        %837 = vmatpush1.msra.mxu0 0.0
        %838 = vmatprep.subr.mxu0 0.0
        %839 = vmatpush1.msra.mxu0 0.0
        %840 = vmatprep.subr.mxu0 0.0
        %841 = vmatpush1.msra.mxu0 0.0
        %842 = vmatprep.subr.mxu0 0.0
        %843 = vmatpush1.msra.mxu0 0.0
        %844 = vmatprep.subr.mxu0 0.0
        %845 = vmatpush1.msra.mxu0 0.0
        %846 = vmatprep.subr.mxu0 0.0
        %847 = vmatpush1.msra.mxu0 0.0
        %848 = vmatprep.subr.mxu0 0.0
        %849 = vmatpush1.msra.mxu0 0.0
        %850 = vmatprep.subr.mxu0 0.0
        %851 = vmatpush1.msra.mxu0 0.0
        %852 = vmatprep.subr.mxu0 0.0
        %853 = vmatpush1.msra.mxu0 0.0
        %854 = vmatprep.subr.mxu0 0.0
        %855 = vmatpush1.msra.mxu0 0.0
        %856 = vmatprep.mubr.f32.mxu0 0.0
        %857 = vmatmul.mubr.f32.gmra.mrb[0].mxu0 %v790
        %v858 = vpop.f32.mrb[0].mxu0
        %v859 = vadd.f32 0.0, %v858
        %v860 = vpop.f32.mrb[0].mxu0
        %861 = vdwg.mxu0
        %v1088 = vunpack.c.l.b16 %v527
        %v1089 = vunpack.c.l.b16 %v528
        %v1090 = vunpack.c.l.b16 %v529
        %v1091 = vunpack.c.l.b16 %v530
        %v1092 = vunpack.c.l.b16 %v531
        %v1093 = vunpack.c.l.b16 %v532
        %v1094 = vunpack.c.l.b16 %v533
        %v1095 = vunpack.c.l.b16 %v534
        %v1096 = vunpack.c.l.b16 %v535
        %v1097 = vunpack.c.l.b16 %v536
        %v1098 = vunpack.c.l.b16 %v537
        %v1099 = vunpack.c.l.b16 %v538
        %v1100 = vunpack.c.l.b16 %v539
        %v1101 = vunpack.c.l.b16 %v540
        %v1102 = vunpack.c.l.b16 %v541
        %v1103 = vunpack.c.l.b16 %v542
        %v1104 = vunpack.c.l.b16 %v543
        %v1105 = vunpack.c.l.b16 %v544
        %v1106 = vunpack.c.l.b16 %v545
        %v1107 = vunpack.c.l.b16 %v546
        %v1108 = vunpack.c.l.b16 %v547
        %v1109 = vunpack.c.l.b16 %v548
        %v1110 = vunpack.c.l.b16 %v549
        %v1111 = vunpack.c.l.b16 %v550
        %v1112 = vunpack.c.l.b16 %v551
        %v1113 = vunpack.c.l.b16 %v552
        %v1114 = vunpack.c.l.b16 %v553
        %v1115 = vunpack.c.l.b16 %v554
        %v1116 = vunpack.c.l.b16 %v555
        %v1117 = vunpack.c.l.b16 %v556
        %v1118 = vunpack.c.l.b16 %v557
        %v1119 = vunpack.c.l.b16 %v558
        %v1120 = vunpack.c.l.b16 %v559
        %v1121 = vunpack.c.l.b16 %v560
        %v1122 = vunpack.c.l.b16 %v561
        %v1123 = vunpack.c.l.b16 %v562
        %v1124 = vunpack.c.l.b16 %v563
        %v1125 = vunpack.c.l.b16 %v564
        %v1126 = vunpack.c.l.b16 %v565
        %v1127 = vunpack.c.l.b16 %v566
        %v1128 = vunpack.c.l.b16 %v567
        %v1129 = vunpack.c.l.b16 %v568
        %v1130 = vunpack.c.l.b16 %v569
        %v1131 = vunpack.c.l.b16 %v570
        %v1132 = vunpack.c.l.b16 %v571
        %v1133 = vunpack.c.l.b16 %v572
        %v1134 = vunpack.c.l.b16 %v573
        %v1135 = vunpack.c.l.b16 %v574
        %v1136 = vunpack.c.l.b16 %v575
        %v1137 = vunpack.c.l.b16 %v576
        %v1138 = vunpack.c.l.b16 %v577
        %v1139 = vunpack.c.l.b16 %v578
        %v1140 = vunpack.c.l.b16 %v579
        %v1141 = vunpack.c.l.b16 %v580
        %v1142 = vunpack.c.l.b16 %v581
        %v1143 = vunpack.c.l.b16 %v582
        %v1144 = vunpack.c.l.b16 %v583
        %v1145 = vunpack.c.l.b16 %v584
        %v1146 = vunpack.c.l.b16 %v585
        %v1147 = vunpack.c.l.b16 %v586
        %v1148 = vunpack.c.l.b16 %v587
        %v1149 = vunpack.c.l.b16 %v588
        %v1150 = vunpack.c.l.b16 %v589
        %v1151 = vunpack.c.l.b16 %v590
        %v1152 = vunpack.c.l.b16 %v591
        %v1153 = vunpack.c.l.b16 %v592
        %v1154 = vunpack.c.l.b16 %v593
        %v1155 = vunpack.c.l.b16 %v594
        %v1156 = vunpack.c.l.b16 %v595
        %v1157 = vunpack.c.l.b16 %v596
        %v1158 = vunpack.c.l.b16 %v597
        %v1159 = vunpack.c.l.b16 %v598
        %v1160 = vunpack.c.l.b16 %v599
        %v1161 = vunpack.c.l.b16 %v600
        %v1162 = vunpack.c.l.b16 %v601
        %v1163 = vunpack.c.l.b16 %v602
        %v1164 = vunpack.c.l.b16 %v603
        %v1165 = vunpack.c.l.b16 %v604
        %v1166 = vunpack.c.l.b16 %v605
        %v1167 = vunpack.c.l.b16 %v606
        %v1168 = vunpack.c.l.b16 %v607
        %v1169 = vunpack.c.l.b16 %v608
        %v1170 = vunpack.c.l.b16 %v609
        %v1171 = vunpack.c.l.b16 %v610
        %v1172 = vunpack.c.l.b16 %v611
        %v1173 = vunpack.c.l.b16 %v612
        %v1174 = vunpack.c.l.b16 %v613
        %v1175 = vunpack.c.l.b16 %v614
        %v1176 = vunpack.c.l.b16 %v615
        %v1177 = vunpack.c.l.b16 %v616
        %v1178 = vunpack.c.l.b16 %v617
        %v1179 = vunpack.c.l.b16 %v618
        %v1180 = vunpack.c.l.b16 %v619
        %v1181 = vunpack.c.l.b16 %v620
        %v1182 = vunpack.c.l.b16 %v621
        %v1183 = vunpack.c.l.b16 %v622
        %v1184 = vunpack.c.l.b16 %v623
        %v1185 = vunpack.c.l.b16 %v624
        %v1186 = vunpack.c.l.b16 %v625
        %v1187 = vunpack.c.l.b16 %v626
        %v1188 = vunpack.c.l.b16 %v627
        %v1189 = vunpack.c.l.b16 %v628
        %v1190 = vunpack.c.l.b16 %v629
        %v1191 = vunpack.c.l.b16 %v630
        %v1192 = vunpack.c.l.b16 %v631
        %v1193 = vunpack.c.l.b16 %v632
        %v1194 = vunpack.c.l.b16 %v633
        %v1195 = vunpack.c.l.b16 %v634
        %v1196 = vunpack.c.l.b16 %v635
        %v1197 = vunpack.c.l.b16 %v636
        %v1198 = vunpack.c.l.b16 %v637
        %v1199 = vunpack.c.l.b16 %v638
        %v1200 = vunpack.c.l.b16 %v639
        %v1201 = vunpack.c.l.b16 %v640
        %v1202 = vunpack.c.l.b16 %v641
        %v1203 = vunpack.c.l.b16 %v642
        %v1204 = vunpack.c.l.b16 %v643
        %v1205 = vunpack.c.l.b16 %v644
        %v1206 = vunpack.c.l.b16 %v645
        %v1207 = vunpack.c.l.b16 %v646
        %v1208 = vunpack.c.l.b16 %v647
        %v1209 = vunpack.c.l.b16 %v648
        %v1210 = vunpack.c.l.b16 %v649
        %v1211 = vunpack.c.l.b16 %v650
        %v1212 = vunpack.c.l.b16 %v651
        %v1213 = vunpack.c.l.b16 %v652
        %v1214 = vunpack.c.l.b16 %v653
        %v1215 = vunpack.c.l.b16 %v654
        %v1216 = vunpack.c.l.b16 %v655
        %v1217 = vunpack.c.l.b16 %v656
        %v1218 = vunpack.c.l.b16 %v657
        %v1219 = vunpack.c.l.b16 %v658
        %v1220 = vunpack.c.l.b16 %v659
        %v1221 = vunpack.c.l.b16 %v660
        %v1222 = vunpack.c.l.b16 %v661
        %v1223 = vunpack.c.l.b16 %v662
        %v1224 = vunpack.c.l.b16 %v663
        %v1225 = vunpack.c.l.b16 %v664
        %v1226 = vunpack.c.l.b16 %v665
        %v1227 = vunpack.c.l.b16 %v666
        %v1228 = vunpack.c.l.b16 %v667
        %v1229 = vunpack.c.l.b16 %v668
        %v1230 = vunpack.c.l.b16 %v669
        %v1231 = vunpack.c.l.b16 %v670
        %v1232 = vunpack.c.l.b16 %v671
        %v1233 = vunpack.c.l.b16 %v672
        %v1234 = vunpack.c.l.b16 %v673
        %v1235 = vunpack.c.l.b16 %v674
        %v1236 = vunpack.c.l.b16 %v675
        %v1237 = vunpack.c.l.b16 %v676
        %v1238 = vunpack.c.l.b16 %v677
        %v1239 = vunpack.c.l.b16 %v678
        %v1240 = vunpack.c.l.b16 %v679
        %v1241 = vunpack.c.l.b16 %v680
        %v1242 = vunpack.c.l.b16 %v681
        %v1243 = vunpack.c.l.b16 %v682
        %v1244 = vunpack.c.l.b16 %v683
        %v1245 = vunpack.c.l.b16 %v684
        %v1246 = vunpack.c.l.b16 %v685
        %v1247 = vunpack.c.l.b16 %v686
        %v1248 = vunpack.c.l.b16 %v687
        %v1249 = vunpack.c.l.b16 %v688
        %v1250 = vunpack.c.l.b16 %v689
        %v1251 = vunpack.c.l.b16 %v690
        %v1252 = vunpack.c.l.b16 %v691
        %v1253 = vunpack.c.l.b16 %v692
        %v1254 = vunpack.c.l.b16 %v693
        %v1255 = vunpack.c.l.b16 %v694
        %v1256 = vunpack.c.l.b16 %v695
        %v1257 = vunpack.c.l.b16 %v696
        %v1258 = vunpack.c.l.b16 %v697
        %v1259 = vunpack.c.l.b16 %v698
        %v1260 = vunpack.c.l.b16 %v699
        %v1261 = vunpack.c.l.b16 %v700
        %v1262 = vunpack.c.l.b16 %v701
        %v1263 = vunpack.c.l.b16 %v702
        %v1264 = vunpack.c.l.b16 %v703
        %v1265 = vunpack.c.l.b16 %v704
        %v1266 = vunpack.c.l.b16 %v705
        %v1267 = vunpack.c.l.b16 %v706
        %v1268 = vunpack.c.l.b16 %v707
        %v1269 = vunpack.c.l.b16 %v708
        %v1270 = vunpack.c.l.b16 %v709
        %v1271 = vunpack.c.l.b16 %v710
        %v1272 = vunpack.c.l.b16 %v711
        %v1273 = vunpack.c.l.b16 %v712
        %v1274 = vunpack.c.l.b16 %v713
        %v1275 = vunpack.c.l.b16 %v714
        %v1276 = vunpack.c.l.b16 %v715
        %v1277 = vunpack.c.l.b16 %v716
        %v1278 = vunpack.c.l.b16 %v717
        %v1279 = vunpack.c.l.b16 %v718
        %v1280 = vunpack.c.l.b16 %v719
        %v1281 = vunpack.c.l.b16 %v720
        %v1282 = vunpack.c.l.b16 %v721
        %v1283 = vunpack.c.l.b16 %v722
        %v1284 = vunpack.c.l.b16 %v723
        %v1285 = vunpack.c.l.b16 %v724
        %v1286 = vunpack.c.l.b16 %v725
        %v1287 = vunpack.c.l.b16 %v726
        %v1288 = vunpack.c.l.b16 %v727
        %v1289 = vunpack.c.l.b16 %v728
        %v1290 = vunpack.c.l.b16 %v729
        %v1291 = vunpack.c.l.b16 %v730
        %v1292 = vunpack.c.l.b16 %v731
        %v1293 = vunpack.c.l.b16 %v732
        %v1294 = vunpack.c.l.b16 %v733
        %v1295 = vunpack.c.l.b16 %v734
        %v1296 = vunpack.c.l.b16 %v735
        %v1297 = vunpack.c.l.b16 %v736
        %v1298 = vunpack.c.l.b16 %v737
        %v1299 = vunpack.c.l.b16 %v738
        %v1300 = vunpack.c.l.b16 %v739
        %v1301 = vunpack.c.l.b16 %v740
        %v1302 = vunpack.c.l.b16 %v741
        %v1303 = vunpack.c.l.b16 %v742
        %v1304 = vunpack.c.l.b16 %v743
        %v1305 = vunpack.c.l.b16 %v744
        %v1306 = vunpack.c.l.b16 %v745
        %v1307 = vunpack.c.l.b16 %v746
        %v1308 = vunpack.c.l.b16 %v747
        %v1309 = vunpack.c.l.b16 %v748
        %v1310 = vunpack.c.l.b16 %v749
        %v1311 = vunpack.c.l.b16 %v750
        %v1312 = vunpack.c.l.b16 %v751
        %v1313 = vunpack.c.l.b16 %v752
        %v1314 = vpack.c.b16 %v1089, %v1088
        %v1315 = vpack.c.b16 %v1091, %v1090
        %v1316 = vpack.c.b16 %v1093, %v1092
        %v1317 = vpack.c.b16 %v1095, %v1094
        %v1318 = vpack.c.b16 %v1097, %v1096
        %v1319 = vpack.c.b16 %v1099, %v1098
        %v1320 = vpack.c.b16 %v1101, %v1100
        %v1321 = vpack.c.b16 %v1103, %v1102
        %v1322 = vpack.c.b16 %v1105, %v1104
        %v1323 = vpack.c.b16 %v1107, %v1106
        %v1324 = vpack.c.b16 %v1109, %v1108
        %v1325 = vpack.c.b16 %v1111, %v1110
        %v1326 = vpack.c.b16 %v1113, %v1112
        %v1327 = vpack.c.b16 %v1115, %v1114
        %v1328 = vpack.c.b16 %v1117, %v1116
        %v1329 = vpack.c.b16 %v1119, %v1118
        %v1330 = vpack.c.b16 %v1121, %v1120
        %v1331 = vpack.c.b16 %v1123, %v1122
        %v1332 = vpack.c.b16 %v1125, %v1124
        %v1333 = vpack.c.b16 %v1127, %v1126
        %v1334 = vpack.c.b16 %v1129, %v1128
        %v1335 = vpack.c.b16 %v1131, %v1130
        %v1336 = vpack.c.b16 %v1133, %v1132
        %v1337 = vpack.c.b16 %v1135, %v1134
        %v1338 = vpack.c.b16 %v1137, %v1136
        %v1339 = vpack.c.b16 %v1139, %v1138
        %v1340 = vpack.c.b16 %v1141, %v1140
        %v1341 = vpack.c.b16 %v1143, %v1142
        %v1342 = vpack.c.b16 %v1145, %v1144
        %v1343 = vpack.c.b16 %v1147, %v1146
        %v1344 = vpack.c.b16 %v1149, %v1148
        %v1345 = vpack.c.b16 %v1151, %v1150
        %v1346 = vpack.c.b16 %v1153, %v1152
        %v1347 = vpack.c.b16 %v1155, %v1154
        %v1348 = vpack.c.b16 %v1157, %v1156
        %v1349 = vpack.c.b16 %v1159, %v1158
        %v1350 = vpack.c.b16 %v1161, %v1160
        %v1351 = vpack.c.b16 %v1163, %v1162
        %v1352 = vpack.c.b16 %v1165, %v1164
        %v1353 = vpack.c.b16 %v1167, %v1166
        %v1354 = vpack.c.b16 %v1169, %v1168
        %v1355 = vpack.c.b16 %v1171, %v1170
        %v1356 = vpack.c.b16 %v1173, %v1172
        %v1357 = vpack.c.b16 %v1175, %v1174
        %v1358 = vpack.c.b16 %v1177, %v1176
        %v1359 = vpack.c.b16 %v1179, %v1178
        %v1360 = vpack.c.b16 %v1181, %v1180
        %v1361 = vpack.c.b16 %v1183, %v1182
        %v1362 = vpack.c.b16 %v1185, %v1184
        %v1363 = vpack.c.b16 %v1187, %v1186
        %v1364 = vpack.c.b16 %v1189, %v1188
        %v1365 = vpack.c.b16 %v1191, %v1190
        %v1366 = vpack.c.b16 %v1193, %v1192
        %v1367 = vpack.c.b16 %v1195, %v1194
        %v1368 = vpack.c.b16 %v1197, %v1196
        %v1369 = vpack.c.b16 %v1199, %v1198
        %v1370 = vpack.c.b16 %v1201, %v1200
        %v1371 = vpack.c.b16 %v1203, %v1202
        %v1372 = vpack.c.b16 %v1205, %v1204
        %v1373 = vpack.c.b16 %v1207, %v1206
        %v1374 = vpack.c.b16 %v1209, %v1208
        %v1375 = vpack.c.b16 %v1211, %v1210
        %v1376 = vpack.c.b16 %v1213, %v1212
        %v1377 = vpack.c.b16 %v1215, %v1214
        %v1378 = vpack.c.b16 %v1217, %v1216
        %v1379 = vpack.c.b16 %v1219, %v1218
        %v1380 = vpack.c.b16 %v1221, %v1220
        %v1381 = vpack.c.b16 %v1223, %v1222
        %v1382 = vpack.c.b16 %v1225, %v1224
        %v1383 = vpack.c.b16 %v1227, %v1226
        %v1384 = vpack.c.b16 %v1229, %v1228
        %v1385 = vpack.c.b16 %v1231, %v1230
        %v1386 = vpack.c.b16 %v1233, %v1232
        %v1387 = vpack.c.b16 %v1235, %v1234
        %v1388 = vpack.c.b16 %v1237, %v1236
        %v1389 = vpack.c.b16 %v1239, %v1238
        %v1390 = vpack.c.b16 %v1241, %v1240
        %v1391 = vpack.c.b16 %v1243, %v1242
        %v1392 = vpack.c.b16 %v1245, %v1244
        %v1393 = vpack.c.b16 %v1247, %v1246
        %v1394 = vpack.c.b16 %v1249, %v1248
        %v1395 = vpack.c.b16 %v1251, %v1250
        %v1396 = vpack.c.b16 %v1253, %v1252
        %v1397 = vpack.c.b16 %v1255, %v1254
        %v1398 = vpack.c.b16 %v1257, %v1256
        %v1399 = vpack.c.b16 %v1259, %v1258
        %v1400 = vpack.c.b16 %v1261, %v1260
        %v1401 = vpack.c.b16 %v1263, %v1262
        %v1402 = vpack.c.b16 %v1265, %v1264
        %v1403 = vpack.c.b16 %v1267, %v1266
        %v1404 = vpack.c.b16 %v1269, %v1268
        %v1405 = vpack.c.b16 %v1271, %v1270
        %v1406 = vpack.c.b16 %v1273, %v1272
        %v1407 = vpack.c.b16 %v1275, %v1274
        %v1408 = vpack.c.b16 %v1277, %v1276
        %v1409 = vpack.c.b16 %v1279, %v1278
        %v1410 = vpack.c.b16 %v1281, %v1280
        %v1411 = vpack.c.b16 %v1283, %v1282
        %v1412 = vpack.c.b16 %v1285, %v1284
        %v1413 = vpack.c.b16 %v1287, %v1286
        %v1414 = vpack.c.b16 %v1289, %v1288
        %v1415 = vpack.c.b16 %v1291, %v1290
        %v1416 = vpack.c.b16 %v1293, %v1292
        %v1417 = vpack.c.b16 %v1295, %v1294
        %v1418 = vpack.c.b16 %v1297, %v1296
        %v1419 = vpack.c.b16 %v1299, %v1298
        %v1420 = vpack.c.b16 %v1301, %v1300
        %v1421 = vpack.c.b16 %v1303, %v1302
        %v1422 = vpack.c.b16 %v1305, %v1304
        %v1423 = vpack.c.b16 %v1307, %v1306
        %v1424 = vpack.c.b16 %v1309, %v1308
        %v1425 = vpack.c.b16 %v1311, %v1310
        %v1426 = vpack.c.b16 %v1313, %v1312
        %vm1540 = vcmask 130048
        %v1542 = vsel %vm1540, %v526, 0
        %1544 = vmatprep.subr.bf16.mxu0 0
        %1545 = vmatpush1.bf16.msra.mxu0 %v1314
        %1546 = vmatprep.subr.bf16.mxu0 0
        %1547 = vmatpush1.bf16.msra.mxu0 %v1315
        %1548 = vmatprep.subr.bf16.mxu0 0
        %1549 = vmatpush1.bf16.msra.mxu0 %v1316
        %1550 = vmatprep.subr.bf16.mxu0 0
        %1551 = vmatpush1.bf16.msra.mxu0 %v1317
        %1552 = vmatprep.subr.bf16.mxu0 0
        %1553 = vmatpush1.bf16.msra.mxu0 %v1318
        %1554 = vmatprep.subr.bf16.mxu0 0
        %1555 = vmatpush1.bf16.msra.mxu0 %v1319
        %1556 = vmatprep.subr.bf16.mxu0 0
        %1557 = vmatpush1.bf16.msra.mxu0 %v1320
        %1558 = vmatprep.subr.bf16.mxu0 0
        %1559 = vmatpush1.bf16.msra.mxu0 %v1321
        %1560 = vmatprep.subr.bf16.mxu0 0
        %1561 = vmatpush1.bf16.msra.mxu0 %v1322
        %1562 = vmatprep.subr.bf16.mxu0 0
        %1563 = vmatpush1.bf16.msra.mxu0 %v1323
        %1564 = vmatprep.subr.bf16.mxu0 0
        %1565 = vmatpush1.bf16.msra.mxu0 %v1324
        %1566 = vmatprep.subr.bf16.mxu0 0
        %1567 = vmatpush1.bf16.msra.mxu0 %v1325
        %1568 = vmatprep.subr.bf16.mxu0 0
        %1569 = vmatpush1.bf16.msra.mxu0 %v1326
        %1570 = vmatprep.subr.bf16.mxu0 0
        %1571 = vmatpush1.bf16.msra.mxu0 %v1327
        %1572 = vmatprep.subr.bf16.mxu0 0
        %1573 = vmatpush1.bf16.msra.mxu0 %v1328
        %1574 = vmatprep.subr.bf16.mxu0 0
        %1575 = vmatpush1.bf16.msra.mxu0 %v1329
        %1576 = vmatprep.mubr.bf16.mxu0 %v513
        %1577 = vmatmul.mubr.bf16.gmra.mrb[0].mxu0 %v512
        %v1578 = vpop.f32.mrb[0].mxu0
        %v1579 = vadd.f32 %v859, %v1578
        %v1580 = vpop.f32.mrb[0].mxu0
        %v1581 = vpop.f32.mrb[0].mxu0
        %v1582 = vpop.f32.mrb[0].mxu0
        %1583 = vdwg.mxu0
        %1584 = vmatprep.subr.bf16.mxu0 0
        %1585 = vmatpush1.bf16.msra.mxu0 %v1330
        %1586 = vmatprep.subr.bf16.mxu0 0
        %1587 = vmatpush1.bf16.msra.mxu0 %v1331
        %1588 = vmatprep.subr.bf16.mxu0 0
        %1589 = vmatpush1.bf16.msra.mxu0 %v1332
        %1590 = vmatprep.subr.bf16.mxu0 0
        %1591 = vmatpush1.bf16.msra.mxu0 %v1333
        %1592 = vmatprep.subr.bf16.mxu0 0
        %1593 = vmatpush1.bf16.msra.mxu0 %v1334
        %1594 = vmatprep.subr.bf16.mxu0 0
        %1595 = vmatpush1.bf16.msra.mxu0 %v1335
        %1596 = vmatprep.subr.bf16.mxu0 0
        %1597 = vmatpush1.bf16.msra.mxu0 %v1336
        %1598 = vmatprep.subr.bf16.mxu0 0
        %1599 = vmatpush1.bf16.msra.mxu0 %v1337
        %1600 = vmatprep.subr.bf16.mxu0 0
        %1601 = vmatpush1.bf16.msra.mxu0 %v1338
        %1602 = vmatprep.subr.bf16.mxu0 0
        %1603 = vmatpush1.bf16.msra.mxu0 %v1339
        %1604 = vmatprep.subr.bf16.mxu0 0
        %1605 = vmatpush1.bf16.msra.mxu0 %v1340
        %1606 = vmatprep.subr.bf16.mxu0 0
        %1607 = vmatpush1.bf16.msra.mxu0 %v1341
        %1608 = vmatprep.subr.bf16.mxu0 0
        %1609 = vmatpush1.bf16.msra.mxu0 %v1342
        %1610 = vmatprep.subr.bf16.mxu0 0
        %1611 = vmatpush1.bf16.msra.mxu0 %v1343
        %1612 = vmatprep.subr.bf16.mxu0 0
        %1613 = vmatpush1.bf16.msra.mxu0 %v1344
        %1614 = vmatprep.subr.bf16.mxu0 0
        %1615 = vmatpush1.bf16.msra.mxu0 %v1345
        %1616 = vmatprep.mubr.bf16.mxu0 %v515
        %1617 = vmatmul.mubr.bf16.gmra.mrb[0].mxu0 %v514
        %v1618 = vpop.f32.mrb[0].mxu0
        %v1619 = vadd.f32 %v1579, %v1618
        %v1620 = vpop.f32.mrb[0].mxu0
        %v1621 = vpop.f32.mrb[0].mxu0
        %v1622 = vpop.f32.mrb[0].mxu0
        %1623 = vdwg.mxu0
        %1624 = vmatprep.subr.bf16.mxu0 0
        %1625 = vmatpush1.bf16.msra.mxu0 %v1346
        %1626 = vmatprep.subr.bf16.mxu0 0
        %1627 = vmatpush1.bf16.msra.mxu0 %v1347
        %1628 = vmatprep.subr.bf16.mxu0 0
        %1629 = vmatpush1.bf16.msra.mxu0 %v1348
        %1630 = vmatprep.subr.bf16.mxu0 0
        %1631 = vmatpush1.bf16.msra.mxu0 %v1349
        %1632 = vmatprep.subr.bf16.mxu0 0
        %1633 = vmatpush1.bf16.msra.mxu0 %v1350
        %1634 = vmatprep.subr.bf16.mxu0 0
        %1635 = vmatpush1.bf16.msra.mxu0 %v1351
        %1636 = vmatprep.subr.bf16.mxu0 0
        %1637 = vmatpush1.bf16.msra.mxu0 %v1352
        %1638 = vmatprep.subr.bf16.mxu0 0
        %1639 = vmatpush1.bf16.msra.mxu0 %v1353
        %1640 = vmatprep.subr.bf16.mxu0 0
        %1641 = vmatpush1.bf16.msra.mxu0 %v1354
        %1642 = vmatprep.subr.bf16.mxu0 0
        %1643 = vmatpush1.bf16.msra.mxu0 %v1355
        %1644 = vmatprep.subr.bf16.mxu0 0
        %1645 = vmatpush1.bf16.msra.mxu0 %v1356
        %1646 = vmatprep.subr.bf16.mxu0 0
        %1647 = vmatpush1.bf16.msra.mxu0 %v1357
        %1648 = vmatprep.subr.bf16.mxu0 0
        %1649 = vmatpush1.bf16.msra.mxu0 %v1358
        %1650 = vmatprep.subr.bf16.mxu0 0
        %1651 = vmatpush1.bf16.msra.mxu0 %v1359
        %1652 = vmatprep.subr.bf16.mxu0 0
        %1653 = vmatpush1.bf16.msra.mxu0 %v1360
        %1654 = vmatprep.subr.bf16.mxu0 0
        %1655 = vmatpush1.bf16.msra.mxu0 %v1361
        %1656 = vmatprep.mubr.bf16.mxu0 %v517
        %1657 = vmatmul.mubr.bf16.gmra.mrb[0].mxu0 %v516
        %v1658 = vpop.f32.mrb[0].mxu0
        %v1659 = vadd.f32 %v1619, %v1658
        %v1660 = vpop.f32.mrb[0].mxu0
        %v1661 = vpop.f32.mrb[0].mxu0
        %v1662 = vpop.f32.mrb[0].mxu0
        %1663 = vdwg.mxu0
        %1664 = vmatprep.subr.bf16.mxu0 0
        %1665 = vmatpush1.bf16.msra.mxu0 %v1362
        %1666 = vmatprep.subr.bf16.mxu0 0
        %1667 = vmatpush1.bf16.msra.mxu0 %v1363
        %1668 = vmatprep.subr.bf16.mxu0 0
        %1669 = vmatpush1.bf16.msra.mxu0 %v1364
        %1670 = vmatprep.subr.bf16.mxu0 0
        %1671 = vmatpush1.bf16.msra.mxu0 %v1365
        %1672 = vmatprep.subr.bf16.mxu0 0
        %1673 = vmatpush1.bf16.msra.mxu0 %v1366
        %1674 = vmatprep.subr.bf16.mxu0 0
        %1675 = vmatpush1.bf16.msra.mxu0 %v1367
        %1676 = vmatprep.subr.bf16.mxu0 0
        %1677 = vmatpush1.bf16.msra.mxu0 %v1368
        %1678 = vmatprep.subr.bf16.mxu0 0
        %1679 = vmatpush1.bf16.msra.mxu0 %v1369
        %1680 = vmatprep.subr.bf16.mxu0 0
        %1681 = vmatpush1.bf16.msra.mxu0 %v1370
        %1682 = vmatprep.subr.bf16.mxu0 0
        %1683 = vmatpush1.bf16.msra.mxu0 %v1371
        %1684 = vmatprep.subr.bf16.mxu0 0
        %1685 = vmatpush1.bf16.msra.mxu0 %v1372
        %1686 = vmatprep.subr.bf16.mxu0 0
        %1687 = vmatpush1.bf16.msra.mxu0 %v1373
        %1688 = vmatprep.subr.bf16.mxu0 0
        %1689 = vmatpush1.bf16.msra.mxu0 %v1374
        %1690 = vmatprep.subr.bf16.mxu0 0
        %1691 = vmatpush1.bf16.msra.mxu0 %v1375
        %1692 = vmatprep.subr.bf16.mxu0 0
        %1693 = vmatpush1.bf16.msra.mxu0 %v1376
        %1694 = vmatprep.subr.bf16.mxu0 0
        %1695 = vmatpush1.bf16.msra.mxu0 %v1377
        %1696 = vmatprep.mubr.bf16.mxu0 %v519
        %1697 = vmatmul.mubr.bf16.gmra.mrb[0].mxu0 %v518
        %v1698 = vpop.f32.mrb[0].mxu0
        %v1699 = vadd.f32 %v1659, %v1698
        %v1700 = vpop.f32.mrb[0].mxu0
        %v1701 = vpop.f32.mrb[0].mxu0
        %v1702 = vpop.f32.mrb[0].mxu0
        %1703 = vdwg.mxu0
        %1704 = vmatprep.subr.bf16.mxu0 0
        %1705 = vmatpush1.bf16.msra.mxu0 %v1378
        %1706 = vmatprep.subr.bf16.mxu0 0
        %1707 = vmatpush1.bf16.msra.mxu0 %v1379
        %1708 = vmatprep.subr.bf16.mxu0 0
        %1709 = vmatpush1.bf16.msra.mxu0 %v1380
        %1710 = vmatprep.subr.bf16.mxu0 0
        %1711 = vmatpush1.bf16.msra.mxu0 %v1381
        %1712 = vmatprep.subr.bf16.mxu0 0
        %1713 = vmatpush1.bf16.msra.mxu0 %v1382
        %1714 = vmatprep.subr.bf16.mxu0 0
        %1715 = vmatpush1.bf16.msra.mxu0 %v1383
        %1716 = vmatprep.subr.bf16.mxu0 0
        %1717 = vmatpush1.bf16.msra.mxu0 %v1384
        %1718 = vmatprep.subr.bf16.mxu0 0
        %1719 = vmatpush1.bf16.msra.mxu0 %v1385
        %1720 = vmatprep.subr.bf16.mxu0 0
        %1721 = vmatpush1.bf16.msra.mxu0 %v1386
        %1722 = vmatprep.subr.bf16.mxu0 0
        %1723 = vmatpush1.bf16.msra.mxu0 %v1387
        %1724 = vmatprep.subr.bf16.mxu0 0
        %1725 = vmatpush1.bf16.msra.mxu0 %v1388
        %1726 = vmatprep.subr.bf16.mxu0 0
        %1727 = vmatpush1.bf16.msra.mxu0 %v1389
        %1728 = vmatprep.subr.bf16.mxu0 0
        %1729 = vmatpush1.bf16.msra.mxu0 %v1390
        %1730 = vmatprep.subr.bf16.mxu0 0
        %1731 = vmatpush1.bf16.msra.mxu0 %v1391
        %1732 = vmatprep.subr.bf16.mxu0 0
        %1733 = vmatpush1.bf16.msra.mxu0 %v1392
        %1734 = vmatprep.subr.bf16.mxu0 0
        %1735 = vmatpush1.bf16.msra.mxu0 %v1393
        %1736 = vmatprep.mubr.bf16.mxu0 %v521
        %1737 = vmatmul.mubr.bf16.gmra.mrb[0].mxu0 %v520
        %v1738 = vpop.f32.mrb[0].mxu0
        %v1739 = vadd.f32 %v1699, %v1738
        %v1740 = vpop.f32.mrb[0].mxu0
        %v1741 = vpop.f32.mrb[0].mxu0
        %v1742 = vpop.f32.mrb[0].mxu0
        %1743 = vdwg.mxu0
        %1744 = vmatprep.subr.bf16.mxu0 0
        %1745 = vmatpush1.bf16.msra.mxu0 %v1394
        %1746 = vmatprep.subr.bf16.mxu0 0
        %1747 = vmatpush1.bf16.msra.mxu0 %v1395
        %1748 = vmatprep.subr.bf16.mxu0 0
        %1749 = vmatpush1.bf16.msra.mxu0 %v1396
        %1750 = vmatprep.subr.bf16.mxu0 0
        %1751 = vmatpush1.bf16.msra.mxu0 %v1397
        %1752 = vmatprep.subr.bf16.mxu0 0
        %1753 = vmatpush1.bf16.msra.mxu0 %v1398
        %1754 = vmatprep.subr.bf16.mxu0 0
        %1755 = vmatpush1.bf16.msra.mxu0 %v1399
        %1756 = vmatprep.subr.bf16.mxu0 0
        %1757 = vmatpush1.bf16.msra.mxu0 %v1400
        %1758 = vmatprep.subr.bf16.mxu0 0
        %1759 = vmatpush1.bf16.msra.mxu0 %v1401
        %1760 = vmatprep.subr.bf16.mxu0 0
        %1761 = vmatpush1.bf16.msra.mxu0 %v1402
        %1762 = vmatprep.subr.bf16.mxu0 0
        %1763 = vmatpush1.bf16.msra.mxu0 %v1403
        %1764 = vmatprep.subr.bf16.mxu0 0
        %1765 = vmatpush1.bf16.msra.mxu0 %v1404
        %1766 = vmatprep.subr.bf16.mxu0 0
        %1767 = vmatpush1.bf16.msra.mxu0 %v1405
        %1768 = vmatprep.subr.bf16.mxu0 0
        %1769 = vmatpush1.bf16.msra.mxu0 %v1406
        %1770 = vmatprep.subr.bf16.mxu0 0
        %1771 = vmatpush1.bf16.msra.mxu0 %v1407
        %1772 = vmatprep.subr.bf16.mxu0 0
        %1773 = vmatpush1.bf16.msra.mxu0 %v1408
        %1774 = vmatprep.subr.bf16.mxu0 0
        %1775 = vmatpush1.bf16.msra.mxu0 %v1409
        %1776 = vmatprep.mubr.bf16.mxu0 %v523
        %1777 = vmatmul.mubr.bf16.gmra.mrb[0].mxu0 %v522
        %v1778 = vpop.f32.mrb[0].mxu0
        %v1779 = vadd.f32 %v1739, %v1778
        %v1780 = vpop.f32.mrb[0].mxu0
        %v1781 = vpop.f32.mrb[0].mxu0
        %v1782 = vpop.f32.mrb[0].mxu0
        %1783 = vdwg.mxu0
        %1784 = vmatprep.subr.bf16.mxu0 0
        %1785 = vmatpush1.bf16.msra.mxu0 %v1410
        %1786 = vmatprep.subr.bf16.mxu0 0
        %1787 = vmatpush1.bf16.msra.mxu0 %v1411
        %1788 = vmatprep.subr.bf16.mxu0 0
        %1789 = vmatpush1.bf16.msra.mxu0 %v1412
        %1790 = vmatprep.subr.bf16.mxu0 0
        %1791 = vmatpush1.bf16.msra.mxu0 %v1413
        %1792 = vmatprep.subr.bf16.mxu0 0
        %1793 = vmatpush1.bf16.msra.mxu0 %v1414
        %1794 = vmatprep.subr.bf16.mxu0 0
        %1795 = vmatpush1.bf16.msra.mxu0 %v1415
        %1796 = vmatprep.subr.bf16.mxu0 0
        %1797 = vmatpush1.bf16.msra.mxu0 %v1416
        %1798 = vmatprep.subr.bf16.mxu0 0
        %1799 = vmatpush1.bf16.msra.mxu0 %v1417
        %1800 = vmatprep.subr.bf16.mxu0 0
        %1801 = vmatpush1.bf16.msra.mxu0 %v1418
        %1802 = vmatprep.subr.bf16.mxu0 0
        %1803 = vmatpush1.bf16.msra.mxu0 %v1419
        %1804 = vmatprep.subr.bf16.mxu0 0
        %1805 = vmatpush1.bf16.msra.mxu0 %v1420
        %1806 = vmatprep.subr.bf16.mxu0 0
        %1807 = vmatpush1.bf16.msra.mxu0 %v1421
        %1808 = vmatprep.subr.bf16.mxu0 0
        %1809 = vmatpush1.bf16.msra.mxu0 %v1422
        %1810 = vmatprep.subr.bf16.mxu0 0
        %1811 = vmatpush1.bf16.msra.mxu0 %v1423
        %1812 = vmatprep.subr.bf16.mxu0 0
        %1813 = vmatpush1.bf16.msra.mxu0 %v1424
        %1814 = vmatprep.subr.bf16.mxu0 0
        %1815 = vmatpush1.bf16.msra.mxu0 %v1425
        %1816 = vmatprep.mubr.bf16.mxu0 %v525
        %1817 = vmatmul.mubr.bf16.gmra.mrb[0].mxu0 %v524
        %v1818 = vpop.f32.mrb[0].mxu0
        %v1819 = vadd.f32 %v1779, %v1818
        %v1820 = vpop.f32.mrb[0].mxu0
        %v1821 = vpop.f32.mrb[0].mxu0
        %v1822 = vpop.f32.mrb[0].mxu0
        %1823 = vdwg.mxu0
        %1824 = vmatprep.subr.bf16.mxu0 0
        %1825 = vmatpush1.bf16.msra.mxu0 %v1426
        %1826 = vmatprep.subr.bf16.mxu0 0
        %1827 = vmatpush1.bf16.msra.mxu0 0
        %1828 = vmatprep.subr.bf16.mxu0 0
        %1829 = vmatpush1.bf16.msra.mxu0 0
        %1830 = vmatprep.subr.bf16.mxu0 0
        %1831 = vmatpush1.bf16.msra.mxu0 0
        %1832 = vmatprep.subr.bf16.mxu0 0
        %1833 = vmatpush1.bf16.msra.mxu0 0
        %1834 = vmatprep.subr.bf16.mxu0 0
        %1835 = vmatpush1.bf16.msra.mxu0 0
        %1836 = vmatprep.subr.bf16.mxu0 0
        %1837 = vmatpush1.bf16.msra.mxu0 0
        %1838 = vmatprep.subr.bf16.mxu0 0
        %1839 = vmatpush1.bf16.msra.mxu0 0
        %1840 = vmatprep.subr.bf16.mxu0 0
        %1841 = vmatpush1.bf16.msra.mxu0 0
        %1842 = vmatprep.subr.bf16.mxu0 0
        %1843 = vmatpush1.bf16.msra.mxu0 0
        %1844 = vmatprep.subr.bf16.mxu0 0
        %1845 = vmatpush1.bf16.msra.mxu0 0
        %1846 = vmatprep.subr.bf16.mxu0 0
        %1847 = vmatpush1.bf16.msra.mxu0 0
        %1848 = vmatprep.subr.bf16.mxu0 0
        %1849 = vmatpush1.bf16.msra.mxu0 0
        %1850 = vmatprep.subr.bf16.mxu0 0
        %1851 = vmatpush1.bf16.msra.mxu0 0
        %1852 = vmatprep.subr.bf16.mxu0 0
        %1853 = vmatpush1.bf16.msra.mxu0 0
        %1854 = vmatprep.subr.bf16.mxu0 0
        %1855 = vmatpush1.bf16.msra.mxu0 0
        %1856 = vmatprep.mubr.bf16.mxu0 0
        %1857 = vmatmul.mubr.bf16.gmra.mrb[0].mxu0 %v1542
        %v1858 = vpop.f32.mrb[0].mxu0
        %v1859 = vadd.f32 %v1819, %v1858
        %v1860 = vpop.f32.mrb[0].mxu0
        %v1861 = vpop.f32.mrb[0].mxu0
        %v1862 = vpop.f32.mrb[0].mxu0
        %1863 = vdwg.mxu0
        %v1864 = vld [vmem:[%s5] sm:$0x1]
        %v1866 = vlaneseq
        %v1867 = vshrl.u32 %v1866, 7
        %v1868 = vsub.s32 0, %v1867
        %v1869 = vrot.slane %v1864, %v1868
        %v1871 = vadd.f32 %v1859, %v1869
        %v1872 = vmax.f32 %v1871, 0.0
        %1873 = vst [vmem:[%s298] sm:$0xff] %v1872
        %s1874 = sand.u32 %s168, 1
        %s1875 = scalar_lea.sflag [#allocation4], %s1874
        %s1876 = sand.u32 %s168, 1
        %s1877 = smul.addr %s1876, 8
        %s1878 = scalar_lea.vmem [#allocation7], %s1877
        // Predicated region
        $region53: #{tpu_custom_call.1} parent=43 // pred_check
          %p1879 = pneg %p178
        $region54: #{tpu_custom_call.1} parent=43 // pred_check_branch
          %1881 = sbr.rel (%p1879) target = $region56
        $region55: #{tpu_custom_call.1} parent=43 // pred_region
          %s1883 = ssub.s32 128, 128
          %1884 = vsyncadd %s1875, %s1883
          %s1885 = smul.addr %s24, 128
          %s1886 = scalar_lea.hbm %s6, %s1885
          %s1888 = sshll.u32 %s1878, 4
          %s1889 = int_to_ptr.vmem [resolvable:$true] %s1888
          %1891 = dma.vmem_to_hbm [thread:$0]  %s1889, 128, %s1886, %s1875
        $region56: #{tpu_custom_call.1} parent=43 // pred_fallthru
          _
      $region44: #{tpu_custom_call.1} parent=5 // pred_fallthru
        _
      %p1892 = scmp.le.s32.totalorder 2, %s19
      // Predicated region
      $region57: #{tpu_custom_call.1} parent=5 // pred_check
        %p1893 = pneg %p1892
      $region58: #{tpu_custom_call.1} parent=5 // pred_check_branch
        %1895 = sbr.rel (%p1893) target = $region60
      $region59: #{tpu_custom_call.1} parent=5 // pred_region
        %s1896 = ssub.s32 %s19, 2
        // Predicated region
        $region61: #{tpu_custom_call.1} parent=59 // pred_check
          %p1897 = pneg %p184
        $region62: #{tpu_custom_call.1} parent=59 // pred_check_branch
          %1899 = sbr.rel (%p1897) target = $region64
        $region63: #{tpu_custom_call.1} parent=59 // pred_region
          %s1900 = sand.u32 %s169, 1
          %s1901 = scalar_lea.sflag [#allocation4], %s1900
          %s1902 = sand.u32 %s169, 1
          %s1903 = smul.addr %s1902, 8
          %s1904 = scalar_lea.vmem [#allocation7], %s1903
          %1905 = dma.done %s1901, 128
        $region64: #{tpu_custom_call.1} parent=59 // pred_fallthru
          _
      $region60: #{tpu_custom_call.1} parent=5 // pred_fallthru
        _
    $region6: #{tpu_custom_call.1} parent=1 // loop_footer
      %s23 = sadd.s32 1, %s19
    $region7: #{tpu_custom_call.1} parent=1 // loop_footer_branch
      %18 = sbr.rel target = $region3
    $region8: #{tpu_custom_call.1} parent=1 // loop_exit
      _
    %1906 = vsyncpa [#allocation3], 1
    %s1907 = scalar_lea.sflag [#allocation3], 1
    %1908 = vsyncpa %s1907, 1
    %1909 = vsyncpa [#allocation6], 1
    %1910 = vsyncpa [#allocation4], 1
    %s1911 = scalar_lea.sflag [#allocation4], 1
    %1912 = vsyncpa %s1911, 1

</llo_original>
